<compile_context>
chip_gen: v7x
topology: tpu7x:2x2x1
jax: 0.10.0
libtpu: 0.0.40
codegen_flags: <defaults>
</compile_context>

<pallas_src>
import functools

import jax
import jax.numpy as jnp
from jax.experimental import pallas as pl
from jax.experimental.pallas import tpu as pltpu

# ---- model configuration (module defaults) ----------------------------------
EXTERO_OBS_DIM = 16
REAL_WORLD_OBS_DIM = 16
EXTERO_LAYER_DIMS = (72, 64)
LOCOMOTION_LAYER_DIMS = ()                  # empty -> identity branch
ACTION_LAYER_DIMS = (256, 160, 128)

# lane-aligned padded widths (zero-filled on both producing columns and
# consuming rows, so results are exact: tanh(0) = 0).
OBS_PAD = 128                               # obs 32 -> 128 lanes
EXTERO_PAD = (128, 128)                     # 72 -> 128, 64 -> 128
TRUNK_IN_PAD = 256                          # [extero_feat(128) | obs(128)]
ACTION_PAD = (256, 256, 128)                # 256, 160 -> 256, 128

BATCH = 256                                 # small deterministic test batch


# ---- hardware heuristics ------------------------------------------------------
def _device_kind():
    try:
        return jax.devices()[0].device_kind.lower()
    except Exception:
        return ""


def _dual_tensorcore():
    """v7x has two TensorCores per chip; keep >=2 grid blocks there."""
    k = _device_kind()
    return ("v7" in k) or ("7x" in k)


def _has_bf16_vector_units():
    """v6e/v7x have bf16 VPU/EUP; v5e (and older) do not."""
    k = _device_kind()
    return ("v6" in k) or ("v7" in k) or ("7x" in k)


def _pick_batch_tile(batch):
    """Biggest tile that amortizes per-step overhead; >=2 blocks on dual-TC."""
    min_blocks = 2 if _dual_tensorcore() else 1
    tb = -(-batch // min_blocks)            # ceil
    tb = min(max(tb, 8), 1024)
    return ((tb + 7) // 8) * 8              # sublane-aligned rows


# ---- parameter construction ---------------------------------------------------
def _init_linear(key, in_dim, out_dim):
    """Deterministic PyTorch-style init: U(-1/sqrt(in), 1/sqrt(in))."""
    kw, kb = jax.random.split(key)
    bound = 1.0 / jnp.sqrt(jnp.float32(in_dim))
    w = jax.random.uniform(kw, (in_dim, out_dim), jnp.float32, -bound, bound)
    b = jax.random.uniform(kb, (1, out_dim), jnp.float32, -bound, bound)
    return w, b


def make_params(seed=0):
    """Unpadded f32 params in execution order, matching the PyTorch module."""
    key = jax.random.PRNGKey(seed)
    params = []
    d = EXTERO_OBS_DIM
    for dim in EXTERO_LAYER_DIMS:
        key, sub = jax.random.split(key)
        params.append(_init_linear(sub, d, dim))
        d = dim
    d = d + REAL_WORLD_OBS_DIM              # locomotion branch is identity
    for dim in ACTION_LAYER_DIMS:
        key, sub = jax.random.split(key)
        params.append(_init_linear(sub, d, dim))
        d = dim
    return params                           # list of (W[in,out], b[1,out])


def _pad2(a, rows, cols):
    r, c = a.shape
    return jnp.pad(a, ((0, rows - r), (0, cols - c)))


def prepare_kernel_params(params, *, weight_dtype=jnp.bfloat16,
                          act_dtype=jnp.float32):
    """Zero-pad to lane/sublane-aligned shapes and build the fused trunk-0
    weight.  Weights in bf16 (MXU-native); biases in the activation dtype
    (bf16 on v6e/v7x, f32 on v5e)."""
    n_ext = len(EXTERO_LAYER_DIMS)
    ext_params, act_params = params[:n_ext], params[n_ext:]

    flat = []
    # Extero branch.  Layer 0 consumes the full 128-lane padded obs; its weight
    # rows for the locomotion/padding lanes are zero, so only extero lanes act.
    in_rows = OBS_PAD
    for (w, b), out_pad in zip(ext_params, EXTERO_PAD):
        flat.append(_pad2(w, in_rows, out_pad).astype(weight_dtype))
        flat.append(_pad2(b, 1, out_pad).astype(act_dtype))
        in_rows = out_pad

    ext_feat = EXTERO_LAYER_DIMS[-1]        # 64
    ext_feat_pad = EXTERO_PAD[-1]           # 128

    # Trunk layer 0, fused: input is concat([extero_feature(128) | obs(128)]).
    # Fused-weight row layout:
    #   [0:64)    real extero-feature rows
    #   [64:128)  zeros (extero-feature padding lanes)
    #   [128:144) zeros (extero-obs lanes of the raw obs)
    #   [144:160) real locomotion rows
    #   [160:256) zeros (obs padding lanes)
    w0, b0 = act_params[0]                  # (80, 256)
    out0 = ACTION_PAD[0]                    # 256
    fused = jnp.zeros((TRUNK_IN_PAD, out0), jnp.float32)
    fused = fused.at[:ext_feat, :].set(w0[:ext_feat])
    loco_lo = ext_feat_pad + EXTERO_OBS_DIM
    fused = fused.at[loco_lo:loco_lo + REAL_WORLD_OBS_DIM, :].set(w0[ext_feat:])
    flat.append(fused.astype(weight_dtype))
    flat.append(_pad2(b0, 1, out0).astype(act_dtype))
    in_rows = out0

    for (w, b), out_pad in zip(act_params[1:], ACTION_PAD[1:]):
        flat.append(_pad2(w, in_rows, out_pad).astype(weight_dtype))
        flat.append(_pad2(b, 1, out_pad).astype(act_dtype))
        in_rows = out_pad

    # (We0, be0, We1, be1, Wa0_fused, ba0, Wa1, ba1, Wa2, ba2)
    return tuple(flat)


# ---- kernel -------------------------------------------------------------------
def actor_kernel(x_ref,
                 we0_ref, be0_ref, we1_ref, be1_ref,
                 wa0_ref, ba0_ref, wa1_ref, ba1_ref, wa2_ref, ba2_ref,
                 out_ref):
    """One batch tile per grid step; weights stay VMEM-resident.

    MXU operands are bf16, accumulation is f32.  Bias add + tanh run in the
    bias dtype: bf16 on v6e/v7x (bf16 EUP/VPU), f32 on v5e.
    """
    mxu_dtype = we0_ref.dtype               # bf16
    act_dtype = be0_ref.dtype               # bf16 (v6e/v7x) or f32 (v5e)

    def dense(x, w_ref, b_ref):
        y = jnp.dot(x.astype(mxu_dtype), w_ref[...],
                    preferred_element_type=jnp.float32)
        return jnp.tanh(y.astype(act_dtype) + b_ref[...])

    x = x_ref[...].astype(act_dtype)        # (TB, 128) padded obs

    # extero branch (no slicing: zero weight rows mask the non-extero lanes)
    h = dense(x, we0_ref, be0_ref)          # (TB, 128)
    h = dense(h, we1_ref, be1_ref)          # (TB, 128)

    # action trunk layer 0: lane-128-aligned concat + single K=256 matmul
    c = jnp.concatenate([h, x], axis=-1)    # (TB, 256)
    a = dense(c, wa0_ref, ba0_ref)          # (TB, 256)

    # remaining trunk layers
    a = dense(a, wa1_ref, ba1_ref)          # (TB, 256)  (160 real + pad)
    a = dense(a, wa2_ref, ba2_ref)          # (TB, 128)

    out_ref[...] = a.astype(out_ref.dtype)


# ---- wrapper ------------------------------------------------------------------
@functools.partial(jax.jit, static_argnames=("batch_tile",))
def _forward_impl(obs, flat, *, batch_tile):
    obs = obs.astype(jnp.float32)
    b, in_dim = obs.shape
    out_dim = ACTION_LAYER_DIMS[-1]         # 128 (already lane-aligned)

    tb = batch_tile
    n_blocks = (b + tb - 1) // tb
    b_pad = n_blocks * tb
    # single padded input block: rows -> tile multiple, lanes -> 128
    obs_p = jnp.pad(obs, ((0, b_pad - b), (0, OBS_PAD - in_dim)))

    in_specs = [pl.BlockSpec((tb, OBS_PAD), lambda i: (i, 0))]
    # constant index_map -> each parameter is DMA'd once and stays resident
    in_specs += [pl.BlockSpec(p.shape, lambda i: (0, 0)) for p in flat]

    # TODO(synk): for repeated rollout calls with fixed weights, pin the 10
    # weight/bias DMAs across calls via cross-call prefetch (P10) or aliasing.
    logits_pad = pl.pallas_call(
        actor_kernel,
        grid=(n_blocks,),
        in_specs=in_specs,
        out_specs=pl.BlockSpec((tb, out_dim), lambda i: (i, 0)),
        out_shape=jax.ShapeDtypeStruct((b_pad, out_dim), jnp.float32),
        compiler_params=pltpu.CompilerParams(
            dimension_semantics=("parallel",)),
    )(obs_p, *flat)

    return logits_pad[:b]


def actor_net_forward(obs, kernel_params, state=None, *, batch_tile=None):
    """ActorNet.forward: obs -> (logits, state)."""
    # default config: obs is exactly [extero(16) | locomotion(16)]
    assert obs.shape[-1] == EXTERO_OBS_DIM + REAL_WORLD_OBS_DIM, obs.shape
    if batch_tile is None:
        batch_tile = _pick_batch_tile(obs.shape[0])
    logits = _forward_impl(obs, tuple(kernel_params), batch_tile=batch_tile)
    return logits, state


# ---- pure-JAX reference (f32, unpadded) ---------------------------------------
def actor_net_reference(obs, params):
    obs = obs.astype(jnp.float32)
    extero = obs[:, :EXTERO_OBS_DIM]
    loco = obs[:, EXTERO_OBS_DIM:]
    n_ext = len(EXTERO_LAYER_DIMS)
    h = extero
    for w, b in params[:n_ext]:
        h = jnp.tanh(h @ w + b)
    a = jnp.concatenate([h, loco], axis=-1)
    for w, b in params[n_ext:]:
        a = jnp.tanh(a @ w + b)
    return a


if __name__ == "__main__":
    bf16_act = _has_bf16_vector_units()     # bf16 tanh/bias only on v6e/v7x
    act_dtype = jnp.bfloat16 if bf16_act else jnp.float32

    key = jax.random.PRNGKey(0)
    obs = jax.random.normal(
        key, (BATCH, EXTERO_OBS_DIM + REAL_WORLD_OBS_DIM), dtype=jnp.float32)

    params = make_params(seed=0)
    kernel_params = prepare_kernel_params(
        params, weight_dtype=jnp.bfloat16, act_dtype=act_dtype)

    logits, state = actor_net_forward(obs, kernel_params, state=None)
    logits = jax.block_until_ready(logits)

    ref = actor_net_reference(obs, params)
    assert logits.shape == (BATCH, ACTION_LAYER_DIMS[-1])
    # Tolerance is inherent to the bf16 MXU operands; the bf16 tanh/bias path
    # on v6e/v7x consumes a bit more of that budget than the f32 path on v5e.
    tol = 1e-1 if bf16_act else 5e-2
    max_err = float(jnp.max(jnp.abs(logits - ref)))
    assert jnp.allclose(logits, ref, atol=tol, rtol=tol), max_err
    assert state is None

    print("KERNEL_OK")
</pallas_src>

<mosaic_0001>
module attributes {stable_mosaic.version = 11 : i64} {
  func.func @actor_kernel(%arg0: i32, %arg1: memref<256x128xf32, #tpu.memory_space<vmem>>, %arg2: memref<128x128xbf16, #tpu.memory_space<vmem>>, %arg3: memref<1x128xf32, #tpu.memory_space<vmem>>, %arg4: memref<128x128xbf16, #tpu.memory_space<vmem>>, %arg5: memref<1x128xf32, #tpu.memory_space<vmem>>, %arg6: memref<256x256xbf16, #tpu.memory_space<vmem>>, %arg7: memref<1x256xf32, #tpu.memory_space<vmem>>, %arg8: memref<256x256xbf16, #tpu.memory_space<vmem>>, %arg9: memref<1x256xf32, #tpu.memory_space<vmem>>, %arg10: memref<256x128xbf16, #tpu.memory_space<vmem>>, %arg11: memref<1x128xf32, #tpu.memory_space<vmem>>, %arg12: memref<256x128xf32, #tpu.memory_space<vmem>>) attributes {dimension_semantics = [#tpu.dimension_semantics<parallel>], iteration_bounds = array<i64: 1>, scalar_prefetch = 0 : i64, scratch_operands = 0 : i64, tpu.core_type = #tpu.core_type<tc>, window_params = [{transform_indices = @transform_0, window_bounds = array<i64: 256, 128>}, {pipeline_mode = #tpu.pipeline_mode<synchronous>, transform_indices = @transform_1, window_bounds = array<i64: 128, 128>}, {pipeline_mode = #tpu.pipeline_mode<synchronous>, transform_indices = @transform_2, window_bounds = array<i64: 1, 128>}, {pipeline_mode = #tpu.pipeline_mode<synchronous>, transform_indices = @transform_3, window_bounds = array<i64: 128, 128>}, {pipeline_mode = #tpu.pipeline_mode<synchronous>, transform_indices = @transform_4, window_bounds = array<i64: 1, 128>}, {pipeline_mode = #tpu.pipeline_mode<synchronous>, transform_indices = @transform_5, window_bounds = array<i64: 256, 256>}, {pipeline_mode = #tpu.pipeline_mode<synchronous>, transform_indices = @transform_6, window_bounds = array<i64: 1, 256>}, {pipeline_mode = #tpu.pipeline_mode<synchronous>, transform_indices = @transform_7, window_bounds = array<i64: 256, 256>}, {pipeline_mode = #tpu.pipeline_mode<synchronous>, transform_indices = @transform_8, window_bounds = array<i64: 1, 256>}, {pipeline_mode = #tpu.pipeline_mode<synchronous>, transform_indices = @transform_9, window_bounds = array<i64: 256, 128>}, {pipeline_mode = #tpu.pipeline_mode<synchronous>, transform_indices = @transform_10, window_bounds = array<i64: 1, 128>}, {transform_indices = @transform_11, window_bounds = array<i64: 256, 128>}]} {
    %c0 = arith.constant 0 : index
    %c0_0 = arith.constant 0 : index
    %0 = vector.load %arg1[%c0, %c0_0] : memref<256x128xf32, #tpu.memory_space<vmem>>, vector<256x128xf32>
    %1 = arith.truncf %0 : vector<256x128xf32> to vector<256x128xbf16>
    %c0_1 = arith.constant 0 : index
    %c0_2 = arith.constant 0 : index
    %2 = vector.load %arg2[%c0_1, %c0_2] : memref<128x128xbf16, #tpu.memory_space<vmem>>, vector<128x128xbf16>
    %cst = arith.constant dense<0.000000e+00> : vector<256x128xf32>
    %3 = tpu.matmul %1, %2, %cst {dimension_numbers = #tpu.dot_dimension_numbers<[1], [0], [0], [1], [0, 0, 1, 1], [], []>} : vector<256x128xbf16>, vector<128x128xbf16>, vector<256x128xf32> -> vector<256x128xf32>
    %c0_3 = arith.constant 0 : index
    %c0_4 = arith.constant 0 : index
    %4 = vector.load %arg3[%c0_3, %c0_4] : memref<1x128xf32, #tpu.memory_space<vmem>>, vector<1x128xf32>
    %5 = vector.broadcast %4 : vector<1x128xf32> to vector<256x128xf32>
    %6 = arith.addf %3, %5 : vector<256x128xf32>
    %7 = math.tanh %6 : vector<256x128xf32>
    %8 = arith.truncf %7 : vector<256x128xf32> to vector<256x128xbf16>
    %c0_5 = arith.constant 0 : index
    %c0_6 = arith.constant 0 : index
    %9 = vector.load %arg4[%c0_5, %c0_6] : memref<128x128xbf16, #tpu.memory_space<vmem>>, vector<128x128xbf16>
    %cst_7 = arith.constant dense<0.000000e+00> : vector<256x128xf32>
    %10 = tpu.matmul %8, %9, %cst_7 {dimension_numbers = #tpu.dot_dimension_numbers<[1], [0], [0], [1], [0, 0, 1, 1], [], []>} : vector<256x128xbf16>, vector<128x128xbf16>, vector<256x128xf32> -> vector<256x128xf32>
    %c0_8 = arith.constant 0 : index
    %c0_9 = arith.constant 0 : index
    %11 = vector.load %arg5[%c0_8, %c0_9] : memref<1x128xf32, #tpu.memory_space<vmem>>, vector<1x128xf32>
    %12 = vector.broadcast %11 : vector<1x128xf32> to vector<256x128xf32>
    %13 = arith.addf %10, %12 : vector<256x128xf32>
    %14 = math.tanh %13 : vector<256x128xf32>
    %15 = tpu.concatenate %14, %0 in 1 : vector<256x128xf32>, vector<256x128xf32> -> vector<256x256xf32>
    %16 = arith.truncf %15 : vector<256x256xf32> to vector<256x256xbf16>
    %c0_10 = arith.constant 0 : index
    %c0_11 = arith.constant 0 : index
    %17 = vector.load %arg6[%c0_10, %c0_11] : memref<256x256xbf16, #tpu.memory_space<vmem>>, vector<256x256xbf16>
    %cst_12 = arith.constant dense<0.000000e+00> : vector<256x256xf32>
    %18 = tpu.matmul %16, %17, %cst_12 {dimension_numbers = #tpu.dot_dimension_numbers<[1], [0], [0], [1], [0, 0, 1, 1], [], []>} : vector<256x256xbf16>, vector<256x256xbf16>, vector<256x256xf32> -> vector<256x256xf32>
    %c0_13 = arith.constant 0 : index
    %c0_14 = arith.constant 0 : index
    %19 = vector.load %arg7[%c0_13, %c0_14] : memref<1x256xf32, #tpu.memory_space<vmem>>, vector<1x256xf32>
    %20 = vector.broadcast %19 : vector<1x256xf32> to vector<256x256xf32>
    %21 = arith.addf %18, %20 : vector<256x256xf32>
    %22 = math.tanh %21 : vector<256x256xf32>
    %23 = arith.truncf %22 : vector<256x256xf32> to vector<256x256xbf16>
    %c0_15 = arith.constant 0 : index
    %c0_16 = arith.constant 0 : index
    %24 = vector.load %arg8[%c0_15, %c0_16] : memref<256x256xbf16, #tpu.memory_space<vmem>>, vector<256x256xbf16>
    %cst_17 = arith.constant dense<0.000000e+00> : vector<256x256xf32>
    %25 = tpu.matmul %23, %24, %cst_17 {dimension_numbers = #tpu.dot_dimension_numbers<[1], [0], [0], [1], [0, 0, 1, 1], [], []>} : vector<256x256xbf16>, vector<256x256xbf16>, vector<256x256xf32> -> vector<256x256xf32>
    %c0_18 = arith.constant 0 : index
    %c0_19 = arith.constant 0 : index
    %26 = vector.load %arg9[%c0_18, %c0_19] : memref<1x256xf32, #tpu.memory_space<vmem>>, vector<1x256xf32>
    %27 = vector.broadcast %26 : vector<1x256xf32> to vector<256x256xf32>
    %28 = arith.addf %25, %27 : vector<256x256xf32>
    %29 = math.tanh %28 : vector<256x256xf32>
    %30 = arith.truncf %29 : vector<256x256xf32> to vector<256x256xbf16>
    %c0_20 = arith.constant 0 : index
    %c0_21 = arith.constant 0 : index
    %31 = vector.load %arg10[%c0_20, %c0_21] : memref<256x128xbf16, #tpu.memory_space<vmem>>, vector<256x128xbf16>
    %cst_22 = arith.constant dense<0.000000e+00> : vector<256x128xf32>
    %32 = tpu.matmul %30, %31, %cst_22 {dimension_numbers = #tpu.dot_dimension_numbers<[1], [0], [0], [1], [0, 0, 1, 1], [], []>} : vector<256x256xbf16>, vector<256x128xbf16>, vector<256x128xf32> -> vector<256x128xf32>
    %c0_23 = arith.constant 0 : index
    %c0_24 = arith.constant 0 : index
    %33 = vector.load %arg11[%c0_23, %c0_24] : memref<1x128xf32, #tpu.memory_space<vmem>>, vector<1x128xf32>
    %34 = vector.broadcast %33 : vector<1x128xf32> to vector<256x128xf32>
    %35 = arith.addf %32, %34 : vector<256x128xf32>
    %36 = math.tanh %35 : vector<256x128xf32>
    %c0_25 = arith.constant 0 : index
    %c0_26 = arith.constant 0 : index
    %37 = vector.load %arg12[%c0_25, %c0_26] : memref<256x128xf32, #tpu.memory_space<vmem>>, vector<256x128xf32>
    tpu.vector_store %arg12[%c0_25, %c0_26], %36 {strides = array<i32>} : memref<256x128xf32, #tpu.memory_space<vmem>>, vector<256x128xf32>,
    return
  }
  func.func @transform_0(%arg0: i32) -> (i32, i32) {
    %c0_i32 = arith.constant 0 : i32
    %c0_i32_0 = arith.constant 0 : i32
    return %arg0, %c0_i32 : i32, i32
  }
  func.func @transform_1(%arg0: i32) -> (i32, i32) {
    %c0_i32 = arith.constant 0 : i32
    %c0_i32_0 = arith.constant 0 : i32
    %c0_i32_1 = arith.constant 0 : i32
    return %c0_i32, %c0_i32_0 : i32, i32
  }
  func.func @transform_2(%arg0: i32) -> (i32, i32) {
    %c0_i32 = arith.constant 0 : i32
    %c0_i32_0 = arith.constant 0 : i32
    %c0_i32_1 = arith.constant 0 : i32
    return %c0_i32, %c0_i32_0 : i32, i32
  }
  func.func @transform_3(%arg0: i32) -> (i32, i32) {
    %c0_i32 = arith.constant 0 : i32
    %c0_i32_0 = arith.constant 0 : i32
    %c0_i32_1 = arith.constant 0 : i32
    return %c0_i32, %c0_i32_0 : i32, i32
  }
  func.func @transform_4(%arg0: i32) -> (i32, i32) {
    %c0_i32 = arith.constant 0 : i32
    %c0_i32_0 = arith.constant 0 : i32
    %c0_i32_1 = arith.constant 0 : i32
    return %c0_i32, %c0_i32_0 : i32, i32
  }
  func.func @transform_5(%arg0: i32) -> (i32, i32) {
    %c0_i32 = arith.constant 0 : i32
    %c0_i32_0 = arith.constant 0 : i32
    %c0_i32_1 = arith.constant 0 : i32
    return %c0_i32, %c0_i32_0 : i32, i32
  }
  func.func @transform_6(%arg0: i32) -> (i32, i32) {
    %c0_i32 = arith.constant 0 : i32
    %c0_i32_0 = arith.constant 0 : i32
    %c0_i32_1 = arith.constant 0 : i32
    return %c0_i32, %c0_i32_0 : i32, i32
  }
  func.func @transform_7(%arg0: i32) -> (i32, i32) {
    %c0_i32 = arith.constant 0 : i32
    %c0_i32_0 = arith.constant 0 : i32
    %c0_i32_1 = arith.constant 0 : i32
    return %c0_i32, %c0_i32_0 : i32, i32
  }
  func.func @transform_8(%arg0: i32) -> (i32, i32) {
    %c0_i32 = arith.constant 0 : i32
    %c0_i32_0 = arith.constant 0 : i32
    %c0_i32_1 = arith.constant 0 : i32
    return %c0_i32, %c0_i32_0 : i32, i32
  }
  func.func @transform_9(%arg0: i32) -> (i32, i32) {
    %c0_i32 = arith.constant 0 : i32
    %c0_i32_0 = arith.constant 0 : i32
    %c0_i32_1 = arith.constant 0 : i32
    return %c0_i32, %c0_i32_0 : i32, i32
  }
  func.func @transform_10(%arg0: i32) -> (i32, i32) {
    %c0_i32 = arith.constant 0 : i32
    %c0_i32_0 = arith.constant 0 : i32
    %c0_i32_1 = arith.constant 0 : i32
    return %c0_i32, %c0_i32_0 : i32, i32
  }
  func.func @transform_11(%arg0: i32) -> (i32, i32) {
    %c0_i32 = arith.constant 0 : i32
    %c0_i32_0 = arith.constant 0 : i32
    return %arg0, %c0_i32 : i32, i32
  }
}

</mosaic_0001>

<llo_original>
// kernel: _forward_impl.1
$region0: #{_forward_impl.1}
  #allocation0 [shape = 'u32[]', space=smem, size = 0x4, offset = 0x4, fixed_abs, tag = 'smem constant byte address 0x4 - core index']
  #allocation1 [shape = 'u32[144,128]{1,0:T(1,128)}', space=vmem, size = 0x12000, scoped, tag = 'internal scratch']
  %s0 = inlined_call_operand.vmem [shape: f32[256,128], index: 0, kind: input, shape index: {}]
  %s1 = inlined_call_operand.vmem [shape: bf16[128,128], index: 1, kind: input, shape index: {}]
  %s2 = inlined_call_operand.vmem [shape: f32[1,128], index: 2, kind: input, shape index: {}]
  %s3 = inlined_call_operand.vmem [shape: bf16[128,128], index: 3, kind: input, shape index: {}]
  %s4 = inlined_call_operand.vmem [shape: f32[1,128], index: 4, kind: input, shape index: {}]
  %s5 = inlined_call_operand.vmem [shape: bf16[256,256], index: 5, kind: input, shape index: {}]
  %s6 = inlined_call_operand.vmem [shape: f32[1,256], index: 6, kind: input, shape index: {}]
  %s7 = inlined_call_operand.vmem [shape: bf16[256,256], index: 7, kind: input, shape index: {}]
  %s8 = inlined_call_operand.vmem [shape: f32[1,256], index: 8, kind: input, shape index: {}]
  %s9 = inlined_call_operand.vmem [shape: bf16[256,128], index: 9, kind: input, shape index: {}]
  %s10 = inlined_call_operand.vmem [shape: f32[1,128], index: 10, kind: input, shape index: {}]
  %s11 = inlined_call_operand.hbm [shape: f32[256,128], index: 11, kind: output, shape index: {}]
  %s12 = sld [smem:[#allocation0]]
  $region54: #{_forward_impl.1} parent=0
    _
  %s14 = ssub.s32 1, %s12
  %s15 = scalar_select 0, %s14, %s12
  $region1: #{_forward_impl.1} parent=0
    #allocation2 [shape = 'u8[131072]{0}', space=vmem, size = 0x20000, scoped, tag = 'output window, operand 0, single buffered']
    #allocation3 [shape = 's32[1]{0}', space=sflag, size = 0x4, scoped, tag = 'scoped memory for _forward_impl.1']
    %16 = vsyncpa [#allocation3], 0
    // Predicated region
    $region2: #{_forward_impl.1} parent=1 // pred_check
      _
    $region3: #{_forward_impl.1} parent=1 // pred_check_branch
      %18 = sbr.rel (0) target = $region5
    $region4: #{_forward_impl.1} parent=1 // pred_region
      _
    $region5: #{_forward_impl.1} parent=1 // pred_fallthru
      _
    // Predicated region
    $region6: #{_forward_impl.1} parent=1 // pred_check
      _
    $region7: #{_forward_impl.1} parent=1 // pred_check_branch
      %20 = sbr.rel (0) target = $region9
    $region8: #{_forward_impl.1} parent=1 // pred_region
      _
    $region9: #{_forward_impl.1} parent=1 // pred_fallthru
      _
    // Predicated region
    $region10: #{_forward_impl.1} parent=1 // pred_check
      _
    $region11: #{_forward_impl.1} parent=1 // pred_check_branch
      %22 = sbr.rel (0) target = $region13
    $region12: #{_forward_impl.1} parent=1 // pred_region
      _
    $region13: #{_forward_impl.1} parent=1 // pred_fallthru
      _
    // Predicated region
    $region14: #{_forward_impl.1} parent=1 // pred_check
      _
    $region15: #{_forward_impl.1} parent=1 // pred_check_branch
      %24 = sbr.rel (0) target = $region17
    $region16: #{_forward_impl.1} parent=1 // pred_region
      _
    $region17: #{_forward_impl.1} parent=1 // pred_fallthru
      _
    // Predicated region
    $region18: #{_forward_impl.1} parent=1 // pred_check
      _
    $region19: #{_forward_impl.1} parent=1 // pred_check_branch
      %26 = sbr.rel (0) target = $region21
    $region20: #{_forward_impl.1} parent=1 // pred_region
      _
    $region21: #{_forward_impl.1} parent=1 // pred_fallthru
      _
    // Predicated region
    $region22: #{_forward_impl.1} parent=1 // pred_check
      _
    $region23: #{_forward_impl.1} parent=1 // pred_check_branch
      %28 = sbr.rel (0) target = $region25
    $region24: #{_forward_impl.1} parent=1 // pred_region
      _
    $region25: #{_forward_impl.1} parent=1 // pred_fallthru
      _
    // Predicated region
    $region26: #{_forward_impl.1} parent=1 // pred_check
      _
    $region27: #{_forward_impl.1} parent=1 // pred_check_branch
      %30 = sbr.rel (0) target = $region29
    $region28: #{_forward_impl.1} parent=1 // pred_region
      _
    $region29: #{_forward_impl.1} parent=1 // pred_fallthru
      _
    // Predicated region
    $region30: #{_forward_impl.1} parent=1 // pred_check
      _
    $region31: #{_forward_impl.1} parent=1 // pred_check_branch
      %32 = sbr.rel (0) target = $region33
    $region32: #{_forward_impl.1} parent=1 // pred_region
      _
    $region33: #{_forward_impl.1} parent=1 // pred_fallthru
      _
    // Predicated region
    $region34: #{_forward_impl.1} parent=1 // pred_check
      _
    $region35: #{_forward_impl.1} parent=1 // pred_check_branch
      %34 = sbr.rel (0) target = $region37
    $region36: #{_forward_impl.1} parent=1 // pred_region
      _
    $region37: #{_forward_impl.1} parent=1 // pred_fallthru
      _
    // Predicated region
    $region38: #{_forward_impl.1} parent=1 // pred_check
      _
    $region39: #{_forward_impl.1} parent=1 // pred_check_branch
      %36 = sbr.rel (0) target = $region41
    $region40: #{_forward_impl.1} parent=1 // pred_region
      _
    $region41: #{_forward_impl.1} parent=1 // pred_fallthru
      _
    // Predicated region
    $region42: #{_forward_impl.1} parent=1 // pred_check
      _
    $region43: #{_forward_impl.1} parent=1 // pred_check_branch
      %38 = sbr.rel (0) target = $region45
    $region44: #{_forward_impl.1} parent=1 // pred_region
      _
    $region45: #{_forward_impl.1} parent=1 // pred_fallthru
      _
    %v40 = vld [vmem:[%s0] sm:$0xff]
    %v41 = vld [vmem:[%s0 + $0x8] sm:$0xff]
    %v42 = vld [vmem:[%s0 + $0x10] sm:$0xff]
    %v43 = vld [vmem:[%s0 + $0x18] sm:$0xff]
    %v44 = vld [vmem:[%s0 + $0x20] sm:$0xff]
    %v45 = vld [vmem:[%s0 + $0x28] sm:$0xff]
    %v46 = vld [vmem:[%s0 + $0x30] sm:$0xff]
    %v47 = vld [vmem:[%s0 + $0x38] sm:$0xff]
    %v48 = vld [vmem:[%s0 + $0x40] sm:$0xff]
    %v49 = vld [vmem:[%s0 + $0x48] sm:$0xff]
    %v50 = vld [vmem:[%s0 + $0x50] sm:$0xff]
    %v51 = vld [vmem:[%s0 + $0x58] sm:$0xff]
    %v52 = vld [vmem:[%s0 + $0x60] sm:$0xff]
    %v53 = vld [vmem:[%s0 + $0x68] sm:$0xff]
    %v54 = vld [vmem:[%s0 + $0x70] sm:$0xff]
    %v55 = vld [vmem:[%s0 + $0x78] sm:$0xff]
    %v56 = vld [vmem:[%s0 + $0x80] sm:$0xff]
    %v57 = vld [vmem:[%s0 + $0x88] sm:$0xff]
    %v58 = vld [vmem:[%s0 + $0x90] sm:$0xff]
    %v59 = vld [vmem:[%s0 + $0x98] sm:$0xff]
    %v60 = vld [vmem:[%s0 + $0xa0] sm:$0xff]
    %v61 = vld [vmem:[%s0 + $0xa8] sm:$0xff]
    %v62 = vld [vmem:[%s0 + $0xb0] sm:$0xff]
    %v63 = vld [vmem:[%s0 + $0xb8] sm:$0xff]
    %v64 = vld [vmem:[%s0 + $0xc0] sm:$0xff]
    %v65 = vld [vmem:[%s0 + $0xc8] sm:$0xff]
    %v66 = vld [vmem:[%s0 + $0xd0] sm:$0xff]
    %v67 = vld [vmem:[%s0 + $0xd8] sm:$0xff]
    %v68 = vld [vmem:[%s0 + $0xe0] sm:$0xff]
    %v69 = vld [vmem:[%s0 + $0xe8] sm:$0xff]
    %v70 = vld [vmem:[%s0 + $0xf0] sm:$0xff]
    %v71 = vld [vmem:[%s0 + $0xf8] sm:$0xff]
    %v72 = vpack.c.bf16 %v41, %v40
    %v73 = vpack.c.bf16 %v43, %v42
    %v74 = vpack.c.bf16 %v45, %v44
    %v75 = vpack.c.bf16 %v47, %v46
    %v76 = vpack.c.bf16 %v49, %v48
    %v77 = vpack.c.bf16 %v51, %v50
    %v78 = vpack.c.bf16 %v53, %v52
    %v79 = vpack.c.bf16 %v55, %v54
    %v80 = vpack.c.bf16 %v57, %v56
    %v81 = vpack.c.bf16 %v59, %v58
    %v82 = vpack.c.bf16 %v61, %v60
    %v83 = vpack.c.bf16 %v63, %v62
    %v84 = vpack.c.bf16 %v65, %v64
    %v85 = vpack.c.bf16 %v67, %v66
    %v86 = vpack.c.bf16 %v69, %v68
    %v87 = vpack.c.bf16 %v71, %v70
    %v88 = vld [vmem:[%s1] sm:$0xf]
    %v89 = vld [vmem:[%s1 + $0x4] sm:$0xf]
    %v90 = vld [vmem:[%s1 + $0x8] sm:$0xf]
    %v91 = vld [vmem:[%s1 + $0xc] sm:$0xf]
    %v92 = vld [vmem:[%s1 + $0x10] sm:$0xf]
    %v93 = vld [vmem:[%s1 + $0x14] sm:$0xf]
    %v94 = vld [vmem:[%s1 + $0x18] sm:$0xf]
    %v95 = vld [vmem:[%s1 + $0x1c] sm:$0xf]
    %v96 = vld [vmem:[%s1 + $0x20] sm:$0xf]
    %v97 = vld [vmem:[%s1 + $0x24] sm:$0xf]
    %v98 = vld [vmem:[%s1 + $0x28] sm:$0xf]
    %v99 = vld [vmem:[%s1 + $0x2c] sm:$0xf]
    %v100 = vld [vmem:[%s1 + $0x30] sm:$0xf]
    %v101 = vld [vmem:[%s1 + $0x34] sm:$0xf]
    %v102 = vld [vmem:[%s1 + $0x38] sm:$0xf]
    %v103 = vld [vmem:[%s1 + $0x3c] sm:$0xf]
    %v104 = vld [vmem:[%s2] sm:$0x1]
    %v106 = vlaneseq
    %v107 = vshrl.u32 %v106, 7
    %v108 = vsub.s32 0, %v107
    %v109 = vrot.slane %v104, %v108
    %v127 = vunpack.c.l.b16 %v88
    %v128 = vunpack.c.l.b16 %v89
    %v129 = vunpack.c.l.b16 %v90
    %v130 = vunpack.c.l.b16 %v91
    %v131 = vunpack.c.l.b16 %v92
    %v132 = vunpack.c.l.b16 %v93
    %v133 = vunpack.c.l.b16 %v94
    %v134 = vunpack.c.l.b16 %v95
    %v135 = vunpack.c.l.b16 %v96
    %v136 = vunpack.c.l.b16 %v97
    %v137 = vunpack.c.l.b16 %v98
    %v138 = vunpack.c.l.b16 %v99
    %v139 = vunpack.c.l.b16 %v100
    %v140 = vunpack.c.l.b16 %v101
    %v141 = vunpack.c.l.b16 %v102
    %v142 = vunpack.c.l.b16 %v103
    %v143 = vpack.c.b16 %v128, %v127
    %v144 = vpack.c.b16 %v130, %v129
    %v145 = vpack.c.b16 %v132, %v131
    %v146 = vpack.c.b16 %v134, %v133
    %v147 = vpack.c.b16 %v136, %v135
    %v148 = vpack.c.b16 %v138, %v137
    %v149 = vpack.c.b16 %v140, %v139
    %v150 = vpack.c.b16 %v142, %v141
    %159 = vmatprep.subr.bf16.mxu0 0
    %160 = vmatpush1.bf16.msra.mxu0 %v143
    %161 = vmatprep.subr.bf16.mxu0 0
    %162 = vmatpush1.bf16.msra.mxu0 %v144
    %163 = vmatprep.subr.bf16.mxu0 0
    %164 = vmatpush1.bf16.msra.mxu0 %v145
    %165 = vmatprep.subr.bf16.mxu0 0
    %166 = vmatpush1.bf16.msra.mxu0 %v146
    %167 = vmatprep.subr.bf16.mxu0 0
    %168 = vmatpush1.bf16.msra.mxu0 %v147
    %169 = vmatprep.subr.bf16.mxu0 0
    %170 = vmatpush1.bf16.msra.mxu0 %v148
    %171 = vmatprep.subr.bf16.mxu0 0
    %172 = vmatpush1.bf16.msra.mxu0 %v149
    %173 = vmatprep.subr.bf16.mxu0 0
    %174 = vmatpush1.bf16.msra.mxu0 %v150
    %175 = vmatprep.subr.bf16.mxu0 0
    %176 = vmatpush1.bf16.msra.mxu0 0
    %177 = vmatprep.subr.bf16.mxu0 0
    %178 = vmatpush1.bf16.msra.mxu0 0
    %179 = vmatprep.subr.bf16.mxu0 0
    %180 = vmatpush1.bf16.msra.mxu0 0
    %181 = vmatprep.subr.bf16.mxu0 0
    %182 = vmatpush1.bf16.msra.mxu0 0
    %183 = vmatprep.subr.bf16.mxu0 0
    %184 = vmatpush1.bf16.msra.mxu0 0
    %185 = vmatprep.subr.bf16.mxu0 0
    %186 = vmatpush1.bf16.msra.mxu0 0
    %187 = vmatprep.subr.bf16.mxu0 0
    %188 = vmatpush1.bf16.msra.mxu0 0
    %189 = vmatprep.subr.bf16.mxu0 0
    %190 = vmatpush1.bf16.msra.mxu0 0
    %191 = vmatprep.mubr.bf16.mxu0 0
    %192 = vmatmul.mubr.bf16.gmra.mrb[0].mxu0 %v72
    %v193 = vpop.f32.mrb[0].mxu0
    %v194 = vadd.f32 %v109, %v193
    %v195 = vpop.f32.mrb[0].mxu0
    %v196 = vpop.f32.mrb[0].mxu0
    %v197 = vadd.f32 %v109, %v196
    %v198 = vpop.f32.mrb[0].mxu0
    %199 = vmatprep.mubr.bf16.mxu0 0
    %200 = vmatmul.mubr.bf16.gmra.mrb[0].mxu0 %v73
    %v201 = vpop.f32.mrb[0].mxu0
    %v202 = vadd.f32 %v109, %v201
    %v203 = vpop.f32.mrb[0].mxu0
    %v204 = vpop.f32.mrb[0].mxu0
    %v205 = vadd.f32 %v109, %v204
    %v206 = vpop.f32.mrb[0].mxu0
    %207 = vmatprep.mubr.bf16.mxu0 0
    %208 = vmatmul.mubr.bf16.gmra.mrb[0].mxu0 %v74
    %v209 = vpop.f32.mrb[0].mxu0
    %v210 = vadd.f32 %v109, %v209
    %v211 = vpop.f32.mrb[0].mxu0
    %v212 = vpop.f32.mrb[0].mxu0
    %v213 = vadd.f32 %v109, %v212
    %v214 = vpop.f32.mrb[0].mxu0
    %215 = vmatprep.mubr.bf16.mxu0 0
    %216 = vmatmul.mubr.bf16.gmra.mrb[0].mxu0 %v75
    %v217 = vpop.f32.mrb[0].mxu0
    %v218 = vadd.f32 %v109, %v217
    %v219 = vpop.f32.mrb[0].mxu0
    %v220 = vpop.f32.mrb[0].mxu0
    %v221 = vadd.f32 %v109, %v220
    %v222 = vpop.f32.mrb[0].mxu0
    %223 = vmatprep.mubr.bf16.mxu0 0
    %224 = vmatmul.mubr.bf16.gmra.mrb[0].mxu0 %v76
    %v225 = vpop.f32.mrb[0].mxu0
    %v226 = vadd.f32 %v109, %v225
    %v227 = vpop.f32.mrb[0].mxu0
    %v228 = vpop.f32.mrb[0].mxu0
    %v229 = vadd.f32 %v109, %v228
    %v230 = vpop.f32.mrb[0].mxu0
    %231 = vmatprep.mubr.bf16.mxu0 0
    %232 = vmatmul.mubr.bf16.gmra.mrb[0].mxu0 %v77
    %v233 = vpop.f32.mrb[0].mxu0
    %v234 = vadd.f32 %v109, %v233
    %v235 = vpop.f32.mrb[0].mxu0
    %v236 = vpop.f32.mrb[0].mxu0
    %v237 = vadd.f32 %v109, %v236
    %v238 = vpop.f32.mrb[0].mxu0
    %239 = vmatprep.mubr.bf16.mxu0 0
    %240 = vmatmul.mubr.bf16.gmra.mrb[0].mxu0 %v78
    %v241 = vpop.f32.mrb[0].mxu0
    %v242 = vadd.f32 %v109, %v241
    %v243 = vpop.f32.mrb[0].mxu0
    %v244 = vpop.f32.mrb[0].mxu0
    %v245 = vadd.f32 %v109, %v244
    %v246 = vpop.f32.mrb[0].mxu0
    %247 = vmatprep.mubr.bf16.mxu0 0
    %248 = vmatmul.mubr.bf16.gmra.mrb[0].mxu0 %v79
    %v249 = vpop.f32.mrb[0].mxu0
    %v250 = vadd.f32 %v109, %v249
    %v251 = vpop.f32.mrb[0].mxu0
    %v252 = vpop.f32.mrb[0].mxu0
    %v253 = vadd.f32 %v109, %v252
    %v254 = vpop.f32.mrb[0].mxu0
    %255 = vmatprep.mubr.bf16.mxu0 0
    %256 = vmatmul.mubr.bf16.gmra.mrb[0].mxu0 %v80
    %v257 = vpop.f32.mrb[0].mxu0
    %v258 = vadd.f32 %v109, %v257
    %v259 = vpop.f32.mrb[0].mxu0
    %v260 = vpop.f32.mrb[0].mxu0
    %v261 = vadd.f32 %v109, %v260
    %v262 = vpop.f32.mrb[0].mxu0
    %263 = vmatprep.mubr.bf16.mxu0 0
    %264 = vmatmul.mubr.bf16.gmra.mrb[0].mxu0 %v81
    %v265 = vpop.f32.mrb[0].mxu0
    %v266 = vadd.f32 %v109, %v265
    %v267 = vpop.f32.mrb[0].mxu0
    %v268 = vpop.f32.mrb[0].mxu0
    %v269 = vadd.f32 %v109, %v268
    %v270 = vpop.f32.mrb[0].mxu0
    %271 = vmatprep.mubr.bf16.mxu0 0
    %272 = vmatmul.mubr.bf16.gmra.mrb[0].mxu0 %v82
    %v273 = vpop.f32.mrb[0].mxu0
    %v274 = vadd.f32 %v109, %v273
    %v275 = vpop.f32.mrb[0].mxu0
    %v276 = vpop.f32.mrb[0].mxu0
    %v277 = vadd.f32 %v109, %v276
    %v278 = vpop.f32.mrb[0].mxu0
    %279 = vmatprep.mubr.bf16.mxu0 0
    %280 = vmatmul.mubr.bf16.gmra.mrb[0].mxu0 %v83
    %v281 = vpop.f32.mrb[0].mxu0
    %v282 = vadd.f32 %v109, %v281
    %v283 = vpop.f32.mrb[0].mxu0
    %v284 = vpop.f32.mrb[0].mxu0
    %v285 = vadd.f32 %v109, %v284
    %v286 = vpop.f32.mrb[0].mxu0
    %287 = vmatprep.mubr.bf16.mxu0 0
    %288 = vmatmul.mubr.bf16.gmra.mrb[0].mxu0 %v84
    %v289 = vpop.f32.mrb[0].mxu0
    %v290 = vadd.f32 %v109, %v289
    %v291 = vpop.f32.mrb[0].mxu0
    %v292 = vpop.f32.mrb[0].mxu0
    %v293 = vadd.f32 %v109, %v292
    %v294 = vpop.f32.mrb[0].mxu0
    %295 = vmatprep.mubr.bf16.mxu0 0
    %296 = vmatmul.mubr.bf16.gmra.mrb[0].mxu0 %v85
    %v297 = vpop.f32.mrb[0].mxu0
    %v298 = vadd.f32 %v109, %v297
    %v299 = vpop.f32.mrb[0].mxu0
    %v300 = vpop.f32.mrb[0].mxu0
    %v301 = vadd.f32 %v109, %v300
    %v302 = vpop.f32.mrb[0].mxu0
    %303 = vmatprep.mubr.bf16.mxu0 0
    %304 = vmatmul.mubr.bf16.gmra.mrb[0].mxu0 %v86
    %v305 = vpop.f32.mrb[0].mxu0
    %v306 = vadd.f32 %v109, %v305
    %v307 = vpop.f32.mrb[0].mxu0
    %v308 = vpop.f32.mrb[0].mxu0
    %v309 = vadd.f32 %v109, %v308
    %v310 = vpop.f32.mrb[0].mxu0
    %311 = vmatprep.mubr.bf16.mxu0 0
    %312 = vmatmul.mubr.bf16.gmra.mrb[0].mxu0 %v87
    %v313 = vpop.f32.mrb[0].mxu0
    %v314 = vadd.f32 %v109, %v313
    %v315 = vpop.f32.mrb[0].mxu0
    %v316 = vpop.f32.mrb[0].mxu0
    %v317 = vadd.f32 %v109, %v316
    %v318 = vpop.f32.mrb[0].mxu0
    %319 = vdwg.mxu0
    %v320 = vtanh.pop %v194
    %v321 = vtanh.pop %v197
    %v322 = vtanh.pop %v202
    %v323 = vtanh.pop %v205
    %v324 = vtanh.pop %v210
    %v325 = vtanh.pop %v213
    %v326 = vtanh.pop %v218
    %v327 = vtanh.pop %v221
    %v328 = vtanh.pop %v226
    %v329 = vtanh.pop %v229
    %v330 = vtanh.pop %v234
    %v331 = vtanh.pop %v237
    %v332 = vtanh.pop %v242
    %v333 = vtanh.pop %v245
    %v334 = vtanh.pop %v250
    %v335 = vtanh.pop %v253
    %v336 = vtanh.pop %v258
    %v337 = vtanh.pop %v261
    %v338 = vtanh.pop %v266
    %v339 = vtanh.pop %v269
    %v340 = vtanh.pop %v274
    %v341 = vtanh.pop %v277
    %v342 = vtanh.pop %v282
    %v343 = vtanh.pop %v285
    %v344 = vtanh.pop %v290
    %v345 = vtanh.pop %v293
    %v346 = vtanh.pop %v298
    %v347 = vtanh.pop %v301
    %v348 = vtanh.pop %v306
    %v349 = vtanh.pop %v309
    %v350 = vtanh.pop %v314
    %v351 = vtanh.pop %v317
    %v352 = vpack.c.bf16 %v321, %v320
    %v353 = vpack.c.bf16 %v323, %v322
    %v354 = vpack.c.bf16 %v325, %v324
    %v355 = vpack.c.bf16 %v327, %v326
    %v356 = vpack.c.bf16 %v329, %v328
    %v357 = vpack.c.bf16 %v331, %v330
    %v358 = vpack.c.bf16 %v333, %v332
    %v359 = vpack.c.bf16 %v335, %v334
    %v360 = vpack.c.bf16 %v337, %v336
    %v361 = vpack.c.bf16 %v339, %v338
    %v362 = vpack.c.bf16 %v341, %v340
    %v363 = vpack.c.bf16 %v343, %v342
    %v364 = vpack.c.bf16 %v345, %v344
    %v365 = vpack.c.bf16 %v347, %v346
    %v366 = vpack.c.bf16 %v349, %v348
    %v367 = vpack.c.bf16 %v351, %v350
    %v368 = vld [vmem:[%s3] sm:$0xf]
    %v369 = vld [vmem:[%s3 + $0x4] sm:$0xf]
    %v370 = vld [vmem:[%s3 + $0x8] sm:$0xf]
    %v371 = vld [vmem:[%s3 + $0xc] sm:$0xf]
    %v372 = vld [vmem:[%s3 + $0x10] sm:$0xf]
    %v373 = vld [vmem:[%s3 + $0x14] sm:$0xf]
    %v374 = vld [vmem:[%s3 + $0x18] sm:$0xf]
    %v375 = vld [vmem:[%s3 + $0x1c] sm:$0xf]
    %v376 = vld [vmem:[%s3 + $0x20] sm:$0xf]
    %v377 = vld [vmem:[%s3 + $0x24] sm:$0xf]
    %v378 = vld [vmem:[%s3 + $0x28] sm:$0xf]
    %v379 = vld [vmem:[%s3 + $0x2c] sm:$0xf]
    %v380 = vld [vmem:[%s3 + $0x30] sm:$0xf]
    %v381 = vld [vmem:[%s3 + $0x34] sm:$0xf]
    %v382 = vld [vmem:[%s3 + $0x38] sm:$0xf]
    %v383 = vld [vmem:[%s3 + $0x3c] sm:$0xf]
    %v384 = vld [vmem:[%s4] sm:$0x1]
    %v386 = vlaneseq
    %v387 = vshrl.u32 %v386, 7
    %v388 = vsub.s32 0, %v387
    %v389 = vrot.slane %v384, %v388
    %v407 = vunpack.c.l.b16 %v368
    %v408 = vunpack.c.l.b16 %v369
    %v409 = vunpack.c.l.b16 %v370
    %v410 = vunpack.c.l.b16 %v371
    %v411 = vunpack.c.l.b16 %v372
    %v412 = vunpack.c.l.b16 %v373
    %v413 = vunpack.c.l.b16 %v374
    %v414 = vunpack.c.l.b16 %v375
    %v415 = vunpack.c.l.b16 %v376
    %v416 = vunpack.c.l.b16 %v377
    %v417 = vunpack.c.l.b16 %v378
    %v418 = vunpack.c.l.b16 %v379
    %v419 = vunpack.c.l.b16 %v380
    %v420 = vunpack.c.l.b16 %v381
    %v421 = vunpack.c.l.b16 %v382
    %v422 = vunpack.c.l.b16 %v383
    %v423 = vpack.c.b16 %v408, %v407
    %v424 = vpack.c.b16 %v410, %v409
    %v425 = vpack.c.b16 %v412, %v411
    %v426 = vpack.c.b16 %v414, %v413
    %v427 = vpack.c.b16 %v416, %v415
    %v428 = vpack.c.b16 %v418, %v417
    %v429 = vpack.c.b16 %v420, %v419
    %v430 = vpack.c.b16 %v422, %v421
    %439 = vmatprep.subr.bf16.mxu0 0
    %440 = vmatpush1.bf16.msra.mxu0 %v423
    %441 = vmatprep.subr.bf16.mxu0 0
    %442 = vmatpush1.bf16.msra.mxu0 %v424
    %443 = vmatprep.subr.bf16.mxu0 0
    %444 = vmatpush1.bf16.msra.mxu0 %v425
    %445 = vmatprep.subr.bf16.mxu0 0
    %446 = vmatpush1.bf16.msra.mxu0 %v426
    %447 = vmatprep.subr.bf16.mxu0 0
    %448 = vmatpush1.bf16.msra.mxu0 %v427
    %449 = vmatprep.subr.bf16.mxu0 0
    %450 = vmatpush1.bf16.msra.mxu0 %v428
    %451 = vmatprep.subr.bf16.mxu0 0
    %452 = vmatpush1.bf16.msra.mxu0 %v429
    %453 = vmatprep.subr.bf16.mxu0 0
    %454 = vmatpush1.bf16.msra.mxu0 %v430
    %455 = vmatprep.subr.bf16.mxu0 0
    %456 = vmatpush1.bf16.msra.mxu0 0
    %457 = vmatprep.subr.bf16.mxu0 0
    %458 = vmatpush1.bf16.msra.mxu0 0
    %459 = vmatprep.subr.bf16.mxu0 0
    %460 = vmatpush1.bf16.msra.mxu0 0
    %461 = vmatprep.subr.bf16.mxu0 0
    %462 = vmatpush1.bf16.msra.mxu0 0
    %463 = vmatprep.subr.bf16.mxu0 0
    %464 = vmatpush1.bf16.msra.mxu0 0
    %465 = vmatprep.subr.bf16.mxu0 0
    %466 = vmatpush1.bf16.msra.mxu0 0
    %467 = vmatprep.subr.bf16.mxu0 0
    %468 = vmatpush1.bf16.msra.mxu0 0
    %469 = vmatprep.subr.bf16.mxu0 0
    %470 = vmatpush1.bf16.msra.mxu0 0
    %471 = vmatprep.mubr.bf16.mxu0 0
    %472 = vmatmul.mubr.bf16.gmra.mrb[0].mxu0 %v352
    %v473 = vpop.f32.mrb[0].mxu0
    %v474 = vadd.f32 %v389, %v473
    %v475 = vpop.f32.mrb[0].mxu0
    %v476 = vpop.f32.mrb[0].mxu0
    %v477 = vadd.f32 %v389, %v476
    %v478 = vpop.f32.mrb[0].mxu0
    %479 = vmatprep.mubr.bf16.mxu0 0
    %480 = vmatmul.mubr.bf16.gmra.mrb[0].mxu0 %v353
    %v481 = vpop.f32.mrb[0].mxu0
    %v482 = vadd.f32 %v389, %v481
    %v483 = vpop.f32.mrb[0].mxu0
    %v484 = vpop.f32.mrb[0].mxu0
    %v485 = vadd.f32 %v389, %v484
    %v486 = vpop.f32.mrb[0].mxu0
    %487 = vmatprep.mubr.bf16.mxu0 0
    %488 = vmatmul.mubr.bf16.gmra.mrb[0].mxu0 %v354
    %v489 = vpop.f32.mrb[0].mxu0
    %v490 = vadd.f32 %v389, %v489
    %v491 = vpop.f32.mrb[0].mxu0
    %v492 = vpop.f32.mrb[0].mxu0
    %v493 = vadd.f32 %v389, %v492
    %v494 = vpop.f32.mrb[0].mxu0
    %495 = vmatprep.mubr.bf16.mxu0 0
    %496 = vmatmul.mubr.bf16.gmra.mrb[0].mxu0 %v355
    %v497 = vpop.f32.mrb[0].mxu0
    %v498 = vadd.f32 %v389, %v497
    %v499 = vpop.f32.mrb[0].mxu0
    %v500 = vpop.f32.mrb[0].mxu0
    %v501 = vadd.f32 %v389, %v500
    %v502 = vpop.f32.mrb[0].mxu0
    %503 = vmatprep.mubr.bf16.mxu0 0
    %504 = vmatmul.mubr.bf16.gmra.mrb[0].mxu0 %v356
    %v505 = vpop.f32.mrb[0].mxu0
    %v506 = vadd.f32 %v389, %v505
    %v507 = vpop.f32.mrb[0].mxu0
    %v508 = vpop.f32.mrb[0].mxu0
    %v509 = vadd.f32 %v389, %v508
    %v510 = vpop.f32.mrb[0].mxu0
    %511 = vmatprep.mubr.bf16.mxu0 0
    %512 = vmatmul.mubr.bf16.gmra.mrb[0].mxu0 %v357
    %v513 = vpop.f32.mrb[0].mxu0
    %v514 = vadd.f32 %v389, %v513
    %v515 = vpop.f32.mrb[0].mxu0
    %v516 = vpop.f32.mrb[0].mxu0
    %v517 = vadd.f32 %v389, %v516
    %v518 = vpop.f32.mrb[0].mxu0
    %519 = vmatprep.mubr.bf16.mxu0 0
    %520 = vmatmul.mubr.bf16.gmra.mrb[0].mxu0 %v358
    %v521 = vpop.f32.mrb[0].mxu0
    %v522 = vadd.f32 %v389, %v521
    %v523 = vpop.f32.mrb[0].mxu0
    %v524 = vpop.f32.mrb[0].mxu0
    %v525 = vadd.f32 %v389, %v524
    %v526 = vpop.f32.mrb[0].mxu0
    %527 = vmatprep.mubr.bf16.mxu0 0
    %528 = vmatmul.mubr.bf16.gmra.mrb[0].mxu0 %v359
    %v529 = vpop.f32.mrb[0].mxu0
    %v530 = vadd.f32 %v389, %v529
    %v531 = vpop.f32.mrb[0].mxu0
    %v532 = vpop.f32.mrb[0].mxu0
    %v533 = vadd.f32 %v389, %v532
    %v534 = vpop.f32.mrb[0].mxu0
    %535 = vmatprep.mubr.bf16.mxu0 0
    %536 = vmatmul.mubr.bf16.gmra.mrb[0].mxu0 %v360
    %v537 = vpop.f32.mrb[0].mxu0
    %v538 = vadd.f32 %v389, %v537
    %v539 = vpop.f32.mrb[0].mxu0
    %v540 = vpop.f32.mrb[0].mxu0
    %v541 = vadd.f32 %v389, %v540
    %v542 = vpop.f32.mrb[0].mxu0
    %543 = vmatprep.mubr.bf16.mxu0 0
    %544 = vmatmul.mubr.bf16.gmra.mrb[0].mxu0 %v361
    %v545 = vpop.f32.mrb[0].mxu0
    %v546 = vadd.f32 %v389, %v545
    %v547 = vpop.f32.mrb[0].mxu0
    %v548 = vpop.f32.mrb[0].mxu0
    %v549 = vadd.f32 %v389, %v548
    %v550 = vpop.f32.mrb[0].mxu0
    %551 = vmatprep.mubr.bf16.mxu0 0
    %552 = vmatmul.mubr.bf16.gmra.mrb[0].mxu0 %v362
    %v553 = vpop.f32.mrb[0].mxu0
    %v554 = vadd.f32 %v389, %v553
    %v555 = vpop.f32.mrb[0].mxu0
    %v556 = vpop.f32.mrb[0].mxu0
    %v557 = vadd.f32 %v389, %v556
    %v558 = vpop.f32.mrb[0].mxu0
    %559 = vmatprep.mubr.bf16.mxu0 0
    %560 = vmatmul.mubr.bf16.gmra.mrb[0].mxu0 %v363
    %v561 = vpop.f32.mrb[0].mxu0
    %v562 = vadd.f32 %v389, %v561
    %v563 = vpop.f32.mrb[0].mxu0
    %v564 = vpop.f32.mrb[0].mxu0
    %v565 = vadd.f32 %v389, %v564
    %v566 = vpop.f32.mrb[0].mxu0
    %567 = vmatprep.mubr.bf16.mxu0 0
    %568 = vmatmul.mubr.bf16.gmra.mrb[0].mxu0 %v364
    %v569 = vpop.f32.mrb[0].mxu0
    %v570 = vadd.f32 %v389, %v569
    %v571 = vpop.f32.mrb[0].mxu0
    %v572 = vpop.f32.mrb[0].mxu0
    %v573 = vadd.f32 %v389, %v572
    %v574 = vpop.f32.mrb[0].mxu0
    %575 = vmatprep.mubr.bf16.mxu0 0
    %576 = vmatmul.mubr.bf16.gmra.mrb[0].mxu0 %v365
    %v577 = vpop.f32.mrb[0].mxu0
    %v578 = vadd.f32 %v389, %v577
    %v579 = vpop.f32.mrb[0].mxu0
    %v580 = vpop.f32.mrb[0].mxu0
    %v581 = vadd.f32 %v389, %v580
    %v582 = vpop.f32.mrb[0].mxu0
    %583 = vmatprep.mubr.bf16.mxu0 0
    %584 = vmatmul.mubr.bf16.gmra.mrb[0].mxu0 %v366
    %v585 = vpop.f32.mrb[0].mxu0
    %v586 = vadd.f32 %v389, %v585
    %v587 = vpop.f32.mrb[0].mxu0
    %v588 = vpop.f32.mrb[0].mxu0
    %v589 = vadd.f32 %v389, %v588
    %v590 = vpop.f32.mrb[0].mxu0
    %591 = vmatprep.mubr.bf16.mxu0 0
    %592 = vmatmul.mubr.bf16.gmra.mrb[0].mxu0 %v367
    %v593 = vpop.f32.mrb[0].mxu0
    %v594 = vadd.f32 %v389, %v593
    %v595 = vpop.f32.mrb[0].mxu0
    %v596 = vpop.f32.mrb[0].mxu0
    %v597 = vadd.f32 %v389, %v596
    %v598 = vpop.f32.mrb[0].mxu0
    %599 = vdwg.mxu0
    %v600 = vtanh.pop %v474
    %v601 = vtanh.pop %v477
    %v602 = vtanh.pop %v482
    %v603 = vtanh.pop %v485
    %v604 = vtanh.pop %v490
    %v605 = vtanh.pop %v493
    %v606 = vtanh.pop %v498
    %v607 = vtanh.pop %v501
    %v608 = vtanh.pop %v506
    %v609 = vtanh.pop %v509
    %v610 = vtanh.pop %v514
    %v611 = vtanh.pop %v517
    %v612 = vtanh.pop %v522
    %v613 = vtanh.pop %v525
    %v614 = vtanh.pop %v530
    %v615 = vtanh.pop %v533
    %v616 = vtanh.pop %v538
    %v617 = vtanh.pop %v541
    %v618 = vtanh.pop %v546
    %v619 = vtanh.pop %v549
    %v620 = vtanh.pop %v554
    %v621 = vtanh.pop %v557
    %v622 = vtanh.pop %v562
    %v623 = vtanh.pop %v565
    %v624 = vtanh.pop %v570
    %v625 = vtanh.pop %v573
    %v626 = vtanh.pop %v578
    %v627 = vtanh.pop %v581
    %v628 = vtanh.pop %v586
    %v629 = vtanh.pop %v589
    %v630 = vtanh.pop %v594
    %v631 = vtanh.pop %v597
    %v632 = vpack.c.bf16 %v601, %v600
    %v633 = vpack.c.bf16 %v603, %v602
    %v634 = vpack.c.bf16 %v605, %v604
    %v635 = vpack.c.bf16 %v607, %v606
    %v636 = vpack.c.bf16 %v609, %v608
    %v637 = vpack.c.bf16 %v611, %v610
    %v638 = vpack.c.bf16 %v613, %v612
    %v639 = vpack.c.bf16 %v615, %v614
    %v640 = vpack.c.bf16 %v617, %v616
    %v641 = vpack.c.bf16 %v619, %v618
    %v642 = vpack.c.bf16 %v621, %v620
    %v643 = vpack.c.bf16 %v623, %v622
    %v644 = vpack.c.bf16 %v625, %v624
    %v645 = vpack.c.bf16 %v627, %v626
    %v646 = vpack.c.bf16 %v629, %v628
    %v647 = vpack.c.bf16 %v631, %v630
    %v648 = vld [vmem:[%s5] sm:$0xff]
    %v649 = vld [vmem:[%s5 + $0x8] sm:$0xff]
    %v650 = vld [vmem:[%s5 + $0x10] sm:$0xff]
    %v651 = vld [vmem:[%s5 + $0x18] sm:$0xff]
    %v652 = vld [vmem:[%s5 + $0x20] sm:$0xff]
    %v653 = vld [vmem:[%s5 + $0x28] sm:$0xff]
    %v654 = vld [vmem:[%s5 + $0x30] sm:$0xff]
    %v655 = vld [vmem:[%s5 + $0x38] sm:$0xff]
    %v656 = vld [vmem:[%s5 + $0x40] sm:$0xff]
    %v657 = vld [vmem:[%s5 + $0x48] sm:$0xff]
    %v658 = vld [vmem:[%s5 + $0x50] sm:$0xff]
    %v659 = vld [vmem:[%s5 + $0x58] sm:$0xff]
    %v660 = vld [vmem:[%s5 + $0x60] sm:$0xff]
    %v661 = vld [vmem:[%s5 + $0x68] sm:$0xff]
    %v662 = vld [vmem:[%s5 + $0x70] sm:$0xff]
    %v663 = vld [vmem:[%s5 + $0x78] sm:$0xff]
    %v664 = vld [vmem:[%s5 + $0x80] sm:$0xff]
    %v665 = vld [vmem:[%s5 + $0x88] sm:$0xff]
    %v666 = vld [vmem:[%s5 + $0x90] sm:$0xff]
    %v667 = vld [vmem:[%s5 + $0x98] sm:$0xff]
    %v668 = vld [vmem:[%s5 + $0xa0] sm:$0xff]
    %v669 = vld [vmem:[%s5 + $0xa8] sm:$0xff]
    %v670 = vld [vmem:[%s5 + $0xb0] sm:$0xff]
    %v671 = vld [vmem:[%s5 + $0xb8] sm:$0xff]
    %v672 = vld [vmem:[%s5 + $0xc0] sm:$0xff]
    %v673 = vld [vmem:[%s5 + $0xc8] sm:$0xff]
    %v674 = vld [vmem:[%s5 + $0xd0] sm:$0xff]
    %v675 = vld [vmem:[%s5 + $0xd8] sm:$0xff]
    %v676 = vld [vmem:[%s5 + $0xe0] sm:$0xff]
    %v677 = vld [vmem:[%s5 + $0xe8] sm:$0xff]
    %v678 = vld [vmem:[%s5 + $0xf0] sm:$0xff]
    %v679 = vld [vmem:[%s5 + $0xf8] sm:$0xff]
    %v680 = vld [vmem:[%s6] sm:$0x3]
    %v682 = vlaneseq
    %v683 = vshrl.u32 %v682, 7
    %v684 = vsub.s32 0, %v683
    %v685 = vrot.slane %v680, %v684
    %v686 = vlaneseq
    %v687 = vshrl.u32 %v686, 7
    %v688 = vsub.s32 1, %v687
    %v689 = vrot.slane %v680, %v688
    %v724 = vunpack.c.l.b16 %v648
    %v725 = vunpack.c.h.b16 %v648
    %v726 = vunpack.c.l.b16 %v649
    %v727 = vunpack.c.h.b16 %v649
    %v728 = vunpack.c.l.b16 %v650
    %v729 = vunpack.c.h.b16 %v650
    %v730 = vunpack.c.l.b16 %v651
    %v731 = vunpack.c.h.b16 %v651
    %v732 = vunpack.c.l.b16 %v652
    %v733 = vunpack.c.h.b16 %v652
    %v734 = vunpack.c.l.b16 %v653
    %v735 = vunpack.c.h.b16 %v653
    %v736 = vunpack.c.l.b16 %v654
    %v737 = vunpack.c.h.b16 %v654
    %v738 = vunpack.c.l.b16 %v655
    %v739 = vunpack.c.h.b16 %v655
    %v740 = vunpack.c.l.b16 %v656
    %v741 = vunpack.c.h.b16 %v656
    %v742 = vunpack.c.l.b16 %v657
    %v743 = vunpack.c.h.b16 %v657
    %v744 = vunpack.c.l.b16 %v658
    %v745 = vunpack.c.h.b16 %v658
    %v746 = vunpack.c.l.b16 %v659
    %v747 = vunpack.c.h.b16 %v659
    %v748 = vunpack.c.l.b16 %v660
    %v749 = vunpack.c.h.b16 %v660
    %v750 = vunpack.c.l.b16 %v661
    %v751 = vunpack.c.h.b16 %v661
    %v752 = vunpack.c.l.b16 %v662
    %v753 = vunpack.c.h.b16 %v662
    %v754 = vunpack.c.l.b16 %v663
    %v755 = vunpack.c.h.b16 %v663
    %v756 = vunpack.c.l.b16 %v664
    %v757 = vunpack.c.h.b16 %v664
    %v758 = vunpack.c.l.b16 %v665
    %v759 = vunpack.c.h.b16 %v665
    %v760 = vunpack.c.l.b16 %v666
    %v761 = vunpack.c.h.b16 %v666
    %v762 = vunpack.c.l.b16 %v667
    %v763 = vunpack.c.h.b16 %v667
    %v764 = vunpack.c.l.b16 %v668
    %v765 = vunpack.c.h.b16 %v668
    %v766 = vunpack.c.l.b16 %v669
    %v767 = vunpack.c.h.b16 %v669
    %v768 = vunpack.c.l.b16 %v670
    %v769 = vunpack.c.h.b16 %v670
    %v770 = vunpack.c.l.b16 %v671
    %v771 = vunpack.c.h.b16 %v671
    %v772 = vunpack.c.l.b16 %v672
    %v773 = vunpack.c.h.b16 %v672
    %v774 = vunpack.c.l.b16 %v673
    %v775 = vunpack.c.h.b16 %v673
    %v776 = vunpack.c.l.b16 %v674
    %v777 = vunpack.c.h.b16 %v674
    %v778 = vunpack.c.l.b16 %v675
    %v779 = vunpack.c.h.b16 %v675
    %v780 = vunpack.c.l.b16 %v676
    %v781 = vunpack.c.h.b16 %v676
    %v782 = vunpack.c.l.b16 %v677
    %v783 = vunpack.c.h.b16 %v677
    %v784 = vunpack.c.l.b16 %v678
    %v785 = vunpack.c.h.b16 %v678
    %v786 = vunpack.c.l.b16 %v679
    %v787 = vunpack.c.h.b16 %v679
    %v788 = vpack.c.b16 %v726, %v724
    %v789 = vpack.c.b16 %v727, %v725
    %v790 = vpack.c.b16 %v730, %v728
    %v791 = vpack.c.b16 %v731, %v729
    %v792 = vpack.c.b16 %v734, %v732
    %v793 = vpack.c.b16 %v735, %v733
    %v794 = vpack.c.b16 %v738, %v736
    %v795 = vpack.c.b16 %v739, %v737
    %v796 = vpack.c.b16 %v742, %v740
    %v797 = vpack.c.b16 %v743, %v741
    %v798 = vpack.c.b16 %v746, %v744
    %v799 = vpack.c.b16 %v747, %v745
    %v800 = vpack.c.b16 %v750, %v748
    %v801 = vpack.c.b16 %v751, %v749
    %v802 = vpack.c.b16 %v754, %v752
    %v803 = vpack.c.b16 %v755, %v753
    %v804 = vpack.c.b16 %v758, %v756
    %v805 = vpack.c.b16 %v759, %v757
    %v806 = vpack.c.b16 %v762, %v760
    %v807 = vpack.c.b16 %v763, %v761
    %v808 = vpack.c.b16 %v766, %v764
    %v809 = vpack.c.b16 %v767, %v765
    %v810 = vpack.c.b16 %v770, %v768
    %v811 = vpack.c.b16 %v771, %v769
    %v812 = vpack.c.b16 %v774, %v772
    %v813 = vpack.c.b16 %v775, %v773
    %v814 = vpack.c.b16 %v778, %v776
    %v815 = vpack.c.b16 %v779, %v777
    %v816 = vpack.c.b16 %v782, %v780
    %v817 = vpack.c.b16 %v783, %v781
    %v818 = vpack.c.b16 %v786, %v784
    %v819 = vpack.c.b16 %v787, %v785
    %852 = vmatprep.subr.bf16.mxu0 %v789
    %853 = vmatpush1.bf16.msra.mxu0 %v788
    %854 = vmatprep.subr.bf16.mxu0 %v791
    %855 = vmatpush1.bf16.msra.mxu0 %v790
    %856 = vmatprep.subr.bf16.mxu0 %v793
    %857 = vmatpush1.bf16.msra.mxu0 %v792
    %858 = vmatprep.subr.bf16.mxu0 %v795
    %859 = vmatpush1.bf16.msra.mxu0 %v794
    %860 = vmatprep.subr.bf16.mxu0 %v797
    %861 = vmatpush1.bf16.msra.mxu0 %v796
    %862 = vmatprep.subr.bf16.mxu0 %v799
    %863 = vmatpush1.bf16.msra.mxu0 %v798
    %864 = vmatprep.subr.bf16.mxu0 %v801
    %865 = vmatpush1.bf16.msra.mxu0 %v800
    %866 = vmatprep.subr.bf16.mxu0 %v803
    %867 = vmatpush1.bf16.msra.mxu0 %v802
    %868 = vmatprep.subr.bf16.mxu0 %v805
    %869 = vmatpush1.bf16.msra.mxu0 %v804
    %870 = vmatprep.subr.bf16.mxu0 %v807
    %871 = vmatpush1.bf16.msra.mxu0 %v806
    %872 = vmatprep.subr.bf16.mxu0 %v809
    %873 = vmatpush1.bf16.msra.mxu0 %v808
    %874 = vmatprep.subr.bf16.mxu0 %v811
    %875 = vmatpush1.bf16.msra.mxu0 %v810
    %876 = vmatprep.subr.bf16.mxu0 %v813
    %877 = vmatpush1.bf16.msra.mxu0 %v812
    %878 = vmatprep.subr.bf16.mxu0 %v815
    %879 = vmatpush1.bf16.msra.mxu0 %v814
    %880 = vmatprep.subr.bf16.mxu0 %v817
    %881 = vmatpush1.bf16.msra.mxu0 %v816
    %882 = vmatprep.subr.bf16.mxu0 %v819
    %883 = vmatpush1.bf16.msra.mxu0 %v818
    %884 = vmatprep.mubr.bf16.mxu0 %v72
    %885 = vmatmul.mubr.bf16.gmra.mrb[0].mxu0 %v632
    %v886 = vpop.f32.mrb[0].mxu0
    %v887 = vadd.f32 %v685, %v886
    %v888 = vpop.f32.mrb[0].mxu0
    %v889 = vadd.f32 %v689, %v888
    %v890 = vpop.f32.mrb[0].mxu0
    %v891 = vadd.f32 %v685, %v890
    %v892 = vpop.f32.mrb[0].mxu0
    %v893 = vadd.f32 %v689, %v892
    %894 = vmatprep.mubr.bf16.mxu0 %v73
    %895 = vmatmul.mubr.bf16.gmra.mrb[0].mxu0 %v633
    %v896 = vpop.f32.mrb[0].mxu0
    %v897 = vadd.f32 %v685, %v896
    %v898 = vpop.f32.mrb[0].mxu0
    %v899 = vadd.f32 %v689, %v898
    %v900 = vpop.f32.mrb[0].mxu0
    %v901 = vadd.f32 %v685, %v900
    %v902 = vpop.f32.mrb[0].mxu0
    %v903 = vadd.f32 %v689, %v902
    %904 = vmatprep.mubr.bf16.mxu0 %v74
    %905 = vmatmul.mubr.bf16.gmra.mrb[0].mxu0 %v634
    %v906 = vpop.f32.mrb[0].mxu0
    %v907 = vadd.f32 %v685, %v906
    %v908 = vpop.f32.mrb[0].mxu0
    %v909 = vadd.f32 %v689, %v908
    %v910 = vpop.f32.mrb[0].mxu0
    %v911 = vadd.f32 %v685, %v910
    %v912 = vpop.f32.mrb[0].mxu0
    %v913 = vadd.f32 %v689, %v912
    %914 = vmatprep.mubr.bf16.mxu0 %v75
    %915 = vmatmul.mubr.bf16.gmra.mrb[0].mxu0 %v635
    %v916 = vpop.f32.mrb[0].mxu0
    %v917 = vadd.f32 %v685, %v916
    %v918 = vpop.f32.mrb[0].mxu0
    %v919 = vadd.f32 %v689, %v918
    %v920 = vpop.f32.mrb[0].mxu0
    %v921 = vadd.f32 %v685, %v920
    %v922 = vpop.f32.mrb[0].mxu0
    %v923 = vadd.f32 %v689, %v922
    %924 = vmatprep.mubr.bf16.mxu0 %v76
    %925 = vmatmul.mubr.bf16.gmra.mrb[0].mxu0 %v636
    %v926 = vpop.f32.mrb[0].mxu0
    %v927 = vadd.f32 %v685, %v926
    %v928 = vpop.f32.mrb[0].mxu0
    %v929 = vadd.f32 %v689, %v928
    %v930 = vpop.f32.mrb[0].mxu0
    %v931 = vadd.f32 %v685, %v930
    %v932 = vpop.f32.mrb[0].mxu0
    %v933 = vadd.f32 %v689, %v932
    %934 = vmatprep.mubr.bf16.mxu0 %v77
    %935 = vmatmul.mubr.bf16.gmra.mrb[0].mxu0 %v637
    %v936 = vpop.f32.mrb[0].mxu0
    %v937 = vadd.f32 %v685, %v936
    %v938 = vpop.f32.mrb[0].mxu0
    %v939 = vadd.f32 %v689, %v938
    %v940 = vpop.f32.mrb[0].mxu0
    %v941 = vadd.f32 %v685, %v940
    %v942 = vpop.f32.mrb[0].mxu0
    %v943 = vadd.f32 %v689, %v942
    %944 = vmatprep.mubr.bf16.mxu0 %v78
    %945 = vmatmul.mubr.bf16.gmra.mrb[0].mxu0 %v638
    %v946 = vpop.f32.mrb[0].mxu0
    %v947 = vadd.f32 %v685, %v946
    %v948 = vpop.f32.mrb[0].mxu0
    %v949 = vadd.f32 %v689, %v948
    %v950 = vpop.f32.mrb[0].mxu0
    %v951 = vadd.f32 %v685, %v950
    %v952 = vpop.f32.mrb[0].mxu0
    %v953 = vadd.f32 %v689, %v952
    %954 = vmatprep.mubr.bf16.mxu0 %v79
    %955 = vmatmul.mubr.bf16.gmra.mrb[0].mxu0 %v639
    %v956 = vpop.f32.mrb[0].mxu0
    %v957 = vadd.f32 %v685, %v956
    %v958 = vpop.f32.mrb[0].mxu0
    %v959 = vadd.f32 %v689, %v958
    %v960 = vpop.f32.mrb[0].mxu0
    %v961 = vadd.f32 %v685, %v960
    %v962 = vpop.f32.mrb[0].mxu0
    %v963 = vadd.f32 %v689, %v962
    %964 = vmatprep.mubr.bf16.mxu0 %v80
    %965 = vmatmul.mubr.bf16.gmra.mrb[0].mxu0 %v640
    %v966 = vpop.f32.mrb[0].mxu0
    %v967 = vadd.f32 %v685, %v966
    %v968 = vpop.f32.mrb[0].mxu0
    %v969 = vadd.f32 %v689, %v968
    %v970 = vpop.f32.mrb[0].mxu0
    %v971 = vadd.f32 %v685, %v970
    %v972 = vpop.f32.mrb[0].mxu0
    %v973 = vadd.f32 %v689, %v972
    %974 = vmatprep.mubr.bf16.mxu0 %v81
    %975 = vmatmul.mubr.bf16.gmra.mrb[0].mxu0 %v641
    %v976 = vpop.f32.mrb[0].mxu0
    %v977 = vadd.f32 %v685, %v976
    %v978 = vpop.f32.mrb[0].mxu0
    %v979 = vadd.f32 %v689, %v978
    %v980 = vpop.f32.mrb[0].mxu0
    %v981 = vadd.f32 %v685, %v980
    %v982 = vpop.f32.mrb[0].mxu0
    %v983 = vadd.f32 %v689, %v982
    %984 = vmatprep.mubr.bf16.mxu0 %v82
    %985 = vmatmul.mubr.bf16.gmra.mrb[0].mxu0 %v642
    %v986 = vpop.f32.mrb[0].mxu0
    %v987 = vadd.f32 %v685, %v986
    %v988 = vpop.f32.mrb[0].mxu0
    %v989 = vadd.f32 %v689, %v988
    %v990 = vpop.f32.mrb[0].mxu0
    %v991 = vadd.f32 %v685, %v990
    %v992 = vpop.f32.mrb[0].mxu0
    %v993 = vadd.f32 %v689, %v992
    %994 = vmatprep.mubr.bf16.mxu0 %v83
    %995 = vmatmul.mubr.bf16.gmra.mrb[0].mxu0 %v643
    %v996 = vpop.f32.mrb[0].mxu0
    %v997 = vadd.f32 %v685, %v996
    %v998 = vpop.f32.mrb[0].mxu0
    %v999 = vadd.f32 %v689, %v998
    %v1000 = vpop.f32.mrb[0].mxu0
    %v1001 = vadd.f32 %v685, %v1000
    %v1002 = vpop.f32.mrb[0].mxu0
    %v1003 = vadd.f32 %v689, %v1002
    %1004 = vmatprep.mubr.bf16.mxu0 %v84
    %1005 = vmatmul.mubr.bf16.gmra.mrb[0].mxu0 %v644
    %v1006 = vpop.f32.mrb[0].mxu0
    %v1007 = vadd.f32 %v685, %v1006
    %v1008 = vpop.f32.mrb[0].mxu0
    %v1009 = vadd.f32 %v689, %v1008
    %v1010 = vpop.f32.mrb[0].mxu0
    %v1011 = vadd.f32 %v685, %v1010
    %v1012 = vpop.f32.mrb[0].mxu0
    %v1013 = vadd.f32 %v689, %v1012
    %1014 = vmatprep.mubr.bf16.mxu0 %v85
    %1015 = vmatmul.mubr.bf16.gmra.mrb[0].mxu0 %v645
    %v1016 = vpop.f32.mrb[0].mxu0
    %v1017 = vadd.f32 %v685, %v1016
    %v1018 = vpop.f32.mrb[0].mxu0
    %v1019 = vadd.f32 %v689, %v1018
    %v1020 = vpop.f32.mrb[0].mxu0
    %v1021 = vadd.f32 %v685, %v1020
    %v1022 = vpop.f32.mrb[0].mxu0
    %v1023 = vadd.f32 %v689, %v1022
    %1024 = vmatprep.mubr.bf16.mxu0 %v86
    %1025 = vmatmul.mubr.bf16.gmra.mrb[0].mxu0 %v646
    %v1026 = vpop.f32.mrb[0].mxu0
    %v1027 = vadd.f32 %v685, %v1026
    %v1028 = vpop.f32.mrb[0].mxu0
    %v1029 = vadd.f32 %v689, %v1028
    %v1030 = vpop.f32.mrb[0].mxu0
    %v1031 = vadd.f32 %v685, %v1030
    %v1032 = vpop.f32.mrb[0].mxu0
    %v1033 = vadd.f32 %v689, %v1032
    %1034 = vmatprep.mubr.bf16.mxu0 %v87
    %1035 = vmatmul.mubr.bf16.gmra.mrb[0].mxu0 %v647
    %v1036 = vpop.f32.mrb[0].mxu0
    %v1037 = vadd.f32 %v685, %v1036
    %v1038 = vpop.f32.mrb[0].mxu0
    %v1039 = vadd.f32 %v689, %v1038
    %v1040 = vpop.f32.mrb[0].mxu0
    %v1041 = vadd.f32 %v685, %v1040
    %v1042 = vpop.f32.mrb[0].mxu0
    %v1043 = vadd.f32 %v689, %v1042
    %1044 = vdwg.mxu0
    %v1045 = vtanh.pop %v887
    %v1046 = vtanh.pop %v889
    %v1047 = vtanh.pop %v891
    %v1048 = vtanh.pop %v893
    %v1049 = vtanh.pop %v897
    %v1050 = vtanh.pop %v899
    %v1051 = vtanh.pop %v901
    %v1052 = vtanh.pop %v903
    %v1053 = vtanh.pop %v907
    %v1054 = vtanh.pop %v909
    %v1055 = vtanh.pop %v911
    %v1056 = vtanh.pop %v913
    %v1057 = vtanh.pop %v917
    %v1058 = vtanh.pop %v919
    %v1059 = vtanh.pop %v921
    %v1060 = vtanh.pop %v923
    %v1061 = vtanh.pop %v927
    %v1062 = vtanh.pop %v929
    %v1063 = vtanh.pop %v931
    %v1064 = vtanh.pop %v933
    %v1065 = vtanh.pop %v937
    %v1066 = vtanh.pop %v939
    %v1067 = vtanh.pop %v941
    %v1068 = vtanh.pop %v943
    %v1069 = vtanh.pop %v947
    %v1070 = vtanh.pop %v949
    %v1071 = vtanh.pop %v951
    %v1072 = vtanh.pop %v953
    %v1073 = vtanh.pop %v957
    %v1074 = vtanh.pop %v959
    %v1075 = vtanh.pop %v961
    %v1076 = vtanh.pop %v963
    %v1077 = vtanh.pop %v967
    %v1078 = vtanh.pop %v969
    %v1079 = vtanh.pop %v971
    %v1080 = vtanh.pop %v973
    %v1081 = vtanh.pop %v977
    %v1082 = vtanh.pop %v979
    %v1083 = vtanh.pop %v981
    %v1084 = vtanh.pop %v983
    %v1085 = vtanh.pop %v987
    %v1086 = vtanh.pop %v989
    %v1087 = vtanh.pop %v991
    %v1088 = vtanh.pop %v993
    %v1089 = vtanh.pop %v997
    %v1090 = vtanh.pop %v999
    %v1091 = vtanh.pop %v1001
    %v1092 = vtanh.pop %v1003
    %v1093 = vtanh.pop %v1007
    %v1094 = vtanh.pop %v1009
    %v1095 = vtanh.pop %v1011
    %v1096 = vtanh.pop %v1013
    %v1097 = vtanh.pop %v1017
    %v1098 = vtanh.pop %v1019
    %v1099 = vtanh.pop %v1021
    %v1100 = vtanh.pop %v1023
    %v1101 = vtanh.pop %v1027
    %v1102 = vtanh.pop %v1029
    %v1103 = vtanh.pop %v1031
    %v1104 = vtanh.pop %v1033
    %v1105 = vtanh.pop %v1037
    %v1106 = vtanh.pop %v1039
    %v1107 = vtanh.pop %v1041
    %v1108 = vtanh.pop %v1043
    %v1109 = vpack.c.bf16 %v1047, %v1045
    %v1110 = vpack.c.bf16 %v1048, %v1046
    %v1111 = vpack.c.bf16 %v1051, %v1049
    %v1112 = vpack.c.bf16 %v1052, %v1050
    %v1113 = vpack.c.bf16 %v1055, %v1053
    %v1114 = vpack.c.bf16 %v1056, %v1054
    %v1115 = vpack.c.bf16 %v1059, %v1057
    %v1116 = vpack.c.bf16 %v1060, %v1058
    %v1117 = vpack.c.bf16 %v1063, %v1061
    %v1118 = vpack.c.bf16 %v1064, %v1062
    %v1119 = vpack.c.bf16 %v1067, %v1065
    %v1120 = vpack.c.bf16 %v1068, %v1066
    %v1121 = vpack.c.bf16 %v1071, %v1069
    %v1122 = vpack.c.bf16 %v1072, %v1070
    %v1123 = vpack.c.bf16 %v1075, %v1073
    %v1124 = vpack.c.bf16 %v1076, %v1074
    %v1125 = vpack.c.bf16 %v1079, %v1077
    %v1126 = vpack.c.bf16 %v1080, %v1078
    %v1127 = vpack.c.bf16 %v1083, %v1081
    %v1128 = vpack.c.bf16 %v1084, %v1082
    %v1129 = vpack.c.bf16 %v1087, %v1085
    %v1130 = vpack.c.bf16 %v1088, %v1086
    %v1131 = vpack.c.bf16 %v1091, %v1089
    %v1132 = vpack.c.bf16 %v1092, %v1090
    %v1133 = vpack.c.bf16 %v1095, %v1093
    %v1134 = vpack.c.bf16 %v1096, %v1094
    %v1135 = vpack.c.bf16 %v1099, %v1097
    %v1136 = vpack.c.bf16 %v1100, %v1098
    %v1137 = vpack.c.bf16 %v1103, %v1101
    %v1138 = vpack.c.bf16 %v1104, %v1102
    %v1139 = vpack.c.bf16 %v1107, %v1105
    %v1140 = vpack.c.bf16 %v1108, %v1106
    %v1141 = vld [vmem:[%s7] sm:$0xff]
    %v1142 = vld [vmem:[%s7 + $0x8] sm:$0xff]
    %v1143 = vld [vmem:[%s7 + $0x10] sm:$0xff]
    %v1144 = vld [vmem:[%s7 + $0x18] sm:$0xff]
    %v1145 = vld [vmem:[%s7 + $0x20] sm:$0xff]
    %v1146 = vld [vmem:[%s7 + $0x28] sm:$0xff]
    %v1147 = vld [vmem:[%s7 + $0x30] sm:$0xff]
    %v1148 = vld [vmem:[%s7 + $0x38] sm:$0xff]
    %v1149 = vld [vmem:[%s7 + $0x40] sm:$0xff]
    %v1150 = vld [vmem:[%s7 + $0x48] sm:$0xff]
    %v1151 = vld [vmem:[%s7 + $0x50] sm:$0xff]
    %v1152 = vld [vmem:[%s7 + $0x58] sm:$0xff]
    %v1153 = vld [vmem:[%s7 + $0x60] sm:$0xff]
    %v1154 = vld [vmem:[%s7 + $0x68] sm:$0xff]
    %v1155 = vld [vmem:[%s7 + $0x70] sm:$0xff]
    %v1156 = vld [vmem:[%s7 + $0x78] sm:$0xff]
    %v1157 = vld [vmem:[%s7 + $0x80] sm:$0xff]
    %v1158 = vld [vmem:[%s7 + $0x88] sm:$0xff]
    %v1159 = vld [vmem:[%s7 + $0x90] sm:$0xff]
    %v1160 = vld [vmem:[%s7 + $0x98] sm:$0xff]
    %v1161 = vld [vmem:[%s7 + $0xa0] sm:$0xff]
    %v1162 = vld [vmem:[%s7 + $0xa8] sm:$0xff]
    %v1163 = vld [vmem:[%s7 + $0xb0] sm:$0xff]
    %v1164 = vld [vmem:[%s7 + $0xb8] sm:$0xff]
    %v1165 = vld [vmem:[%s7 + $0xc0] sm:$0xff]
    %v1166 = vld [vmem:[%s7 + $0xc8] sm:$0xff]
    %v1167 = vld [vmem:[%s7 + $0xd0] sm:$0xff]
    %v1168 = vld [vmem:[%s7 + $0xd8] sm:$0xff]
    %v1169 = vld [vmem:[%s7 + $0xe0] sm:$0xff]
    %v1170 = vld [vmem:[%s7 + $0xe8] sm:$0xff]
    %v1171 = vld [vmem:[%s7 + $0xf0] sm:$0xff]
    %v1172 = vld [vmem:[%s7 + $0xf8] sm:$0xff]
    %v1173 = vld [vmem:[%s8] sm:$0x3]
    %v1175 = vlaneseq
    %v1176 = vshrl.u32 %v1175, 7
    %v1177 = vsub.s32 0, %v1176
    %v1178 = vrot.slane %v1173, %v1177
    %v1179 = vlaneseq
    %v1180 = vshrl.u32 %v1179, 7
    %v1181 = vsub.s32 1, %v1180
    %v1182 = vrot.slane %v1173, %v1181
    %v1217 = vunpack.c.l.b16 %v1141
    %v1218 = vunpack.c.h.b16 %v1141
    %v1219 = vunpack.c.l.b16 %v1142
    %v1220 = vunpack.c.h.b16 %v1142
    %v1221 = vunpack.c.l.b16 %v1143
    %v1222 = vunpack.c.h.b16 %v1143
    %v1223 = vunpack.c.l.b16 %v1144
    %v1224 = vunpack.c.h.b16 %v1144
    %v1225 = vunpack.c.l.b16 %v1145
    %v1226 = vunpack.c.h.b16 %v1145
    %v1227 = vunpack.c.l.b16 %v1146
    %v1228 = vunpack.c.h.b16 %v1146
    %v1229 = vunpack.c.l.b16 %v1147
    %v1230 = vunpack.c.h.b16 %v1147
    %v1231 = vunpack.c.l.b16 %v1148
    %v1232 = vunpack.c.h.b16 %v1148
    %v1233 = vunpack.c.l.b16 %v1149
    %v1234 = vunpack.c.h.b16 %v1149
    %v1235 = vunpack.c.l.b16 %v1150
    %v1236 = vunpack.c.h.b16 %v1150
    %v1237 = vunpack.c.l.b16 %v1151
    %v1238 = vunpack.c.h.b16 %v1151
    %v1239 = vunpack.c.l.b16 %v1152
    %v1240 = vunpack.c.h.b16 %v1152
    %v1241 = vunpack.c.l.b16 %v1153
    %v1242 = vunpack.c.h.b16 %v1153
    %v1243 = vunpack.c.l.b16 %v1154
    %v1244 = vunpack.c.h.b16 %v1154
    %v1245 = vunpack.c.l.b16 %v1155
    %v1246 = vunpack.c.h.b16 %v1155
    %v1247 = vunpack.c.l.b16 %v1156
    %v1248 = vunpack.c.h.b16 %v1156
    %v1249 = vunpack.c.l.b16 %v1157
    %v1250 = vunpack.c.h.b16 %v1157
    %v1251 = vunpack.c.l.b16 %v1158
    %v1252 = vunpack.c.h.b16 %v1158
    %v1253 = vunpack.c.l.b16 %v1159
    %v1254 = vunpack.c.h.b16 %v1159
    %v1255 = vunpack.c.l.b16 %v1160
    %v1256 = vunpack.c.h.b16 %v1160
    %v1257 = vunpack.c.l.b16 %v1161
    %v1258 = vunpack.c.h.b16 %v1161
    %v1259 = vunpack.c.l.b16 %v1162
    %v1260 = vunpack.c.h.b16 %v1162
    %v1261 = vunpack.c.l.b16 %v1163
    %v1262 = vunpack.c.h.b16 %v1163
    %v1263 = vunpack.c.l.b16 %v1164
    %v1264 = vunpack.c.h.b16 %v1164
    %v1265 = vunpack.c.l.b16 %v1165
    %v1266 = vunpack.c.h.b16 %v1165
    %v1267 = vunpack.c.l.b16 %v1166
    %v1268 = vunpack.c.h.b16 %v1166
    %v1269 = vunpack.c.l.b16 %v1167
    %v1270 = vunpack.c.h.b16 %v1167
    %v1271 = vunpack.c.l.b16 %v1168
    %v1272 = vunpack.c.h.b16 %v1168
    %v1273 = vunpack.c.l.b16 %v1169
    %v1274 = vunpack.c.h.b16 %v1169
    %v1275 = vunpack.c.l.b16 %v1170
    %v1276 = vunpack.c.h.b16 %v1170
    %v1277 = vunpack.c.l.b16 %v1171
    %v1278 = vunpack.c.h.b16 %v1171
    %v1279 = vunpack.c.l.b16 %v1172
    %v1280 = vunpack.c.h.b16 %v1172
    %v1281 = vpack.c.b16 %v1219, %v1217
    %v1282 = vpack.c.b16 %v1220, %v1218
    %v1283 = vpack.c.b16 %v1223, %v1221
    %v1284 = vpack.c.b16 %v1224, %v1222
    %v1285 = vpack.c.b16 %v1227, %v1225
    %v1286 = vpack.c.b16 %v1228, %v1226
    %v1287 = vpack.c.b16 %v1231, %v1229
    %v1288 = vpack.c.b16 %v1232, %v1230
    %v1289 = vpack.c.b16 %v1235, %v1233
    %v1290 = vpack.c.b16 %v1236, %v1234
    %v1291 = vpack.c.b16 %v1239, %v1237
    %v1292 = vpack.c.b16 %v1240, %v1238
    %v1293 = vpack.c.b16 %v1243, %v1241
    %v1294 = vpack.c.b16 %v1244, %v1242
    %v1295 = vpack.c.b16 %v1247, %v1245
    %v1296 = vpack.c.b16 %v1248, %v1246
    %v1297 = vpack.c.b16 %v1251, %v1249
    %v1298 = vpack.c.b16 %v1252, %v1250
    %v1299 = vpack.c.b16 %v1255, %v1253
    %v1300 = vpack.c.b16 %v1256, %v1254
    %v1301 = vpack.c.b16 %v1259, %v1257
    %v1302 = vpack.c.b16 %v1260, %v1258
    %v1303 = vpack.c.b16 %v1263, %v1261
    %v1304 = vpack.c.b16 %v1264, %v1262
    %v1305 = vpack.c.b16 %v1267, %v1265
    %v1306 = vpack.c.b16 %v1268, %v1266
    %v1307 = vpack.c.b16 %v1271, %v1269
    %v1308 = vpack.c.b16 %v1272, %v1270
    %v1309 = vpack.c.b16 %v1275, %v1273
    %v1310 = vpack.c.b16 %v1276, %v1274
    %v1311 = vpack.c.b16 %v1279, %v1277
    %v1312 = vpack.c.b16 %v1280, %v1278
    %1345 = vmatprep.subr.bf16.mxu0 %v1282
    %1346 = vmatpush1.bf16.msra.mxu0 %v1281
    %1347 = vmatprep.subr.bf16.mxu0 %v1284
    %1348 = vmatpush1.bf16.msra.mxu0 %v1283
    %1349 = vmatprep.subr.bf16.mxu0 %v1286
    %1350 = vmatpush1.bf16.msra.mxu0 %v1285
    %1351 = vmatprep.subr.bf16.mxu0 %v1288
    %1352 = vmatpush1.bf16.msra.mxu0 %v1287
    %1353 = vmatprep.subr.bf16.mxu0 %v1290
    %1354 = vmatpush1.bf16.msra.mxu0 %v1289
    %1355 = vmatprep.subr.bf16.mxu0 %v1292
    %1356 = vmatpush1.bf16.msra.mxu0 %v1291
    %1357 = vmatprep.subr.bf16.mxu0 %v1294
    %1358 = vmatpush1.bf16.msra.mxu0 %v1293
    %1359 = vmatprep.subr.bf16.mxu0 %v1296
    %1360 = vmatpush1.bf16.msra.mxu0 %v1295
    %1361 = vmatprep.subr.bf16.mxu0 %v1298
    %1362 = vmatpush1.bf16.msra.mxu0 %v1297
    %1363 = vmatprep.subr.bf16.mxu0 %v1300
    %1364 = vmatpush1.bf16.msra.mxu0 %v1299
    %1365 = vmatprep.subr.bf16.mxu0 %v1302
    %1366 = vmatpush1.bf16.msra.mxu0 %v1301
    %1367 = vmatprep.subr.bf16.mxu0 %v1304
    %1368 = vmatpush1.bf16.msra.mxu0 %v1303
    %1369 = vmatprep.subr.bf16.mxu0 %v1306
    %1370 = vmatpush1.bf16.msra.mxu0 %v1305
    %1371 = vmatprep.subr.bf16.mxu0 %v1308
    %1372 = vmatpush1.bf16.msra.mxu0 %v1307
    %1373 = vmatprep.subr.bf16.mxu0 %v1310
    %1374 = vmatpush1.bf16.msra.mxu0 %v1309
    %1375 = vmatprep.subr.bf16.mxu0 %v1312
    %1376 = vmatpush1.bf16.msra.mxu0 %v1311
    %1377 = vmatprep.mubr.bf16.mxu0 %v1110
    %1378 = vmatmul.mubr.bf16.gmra.mrb[0].mxu0 %v1109
    %v1379 = vpop.f32.mrb[0].mxu0
    %v1380 = vadd.f32 %v1178, %v1379
    %v1381 = vpop.f32.mrb[0].mxu0
    %v1382 = vadd.f32 %v1182, %v1381
    %v1383 = vpop.f32.mrb[0].mxu0
    %v1384 = vadd.f32 %v1178, %v1383
    %v1385 = vpop.f32.mrb[0].mxu0
    %v1386 = vadd.f32 %v1182, %v1385
    %1387 = vmatprep.mubr.bf16.mxu0 %v1112
    %1388 = vmatmul.mubr.bf16.gmra.mrb[0].mxu0 %v1111
    %v1389 = vpop.f32.mrb[0].mxu0
    %v1390 = vadd.f32 %v1178, %v1389
    %v1391 = vpop.f32.mrb[0].mxu0
    %v1392 = vadd.f32 %v1182, %v1391
    %v1393 = vpop.f32.mrb[0].mxu0
    %v1394 = vadd.f32 %v1178, %v1393
    %v1395 = vpop.f32.mrb[0].mxu0
    %v1396 = vadd.f32 %v1182, %v1395
    %1397 = vmatprep.mubr.bf16.mxu0 %v1114
    %1398 = vmatmul.mubr.bf16.gmra.mrb[0].mxu0 %v1113
    %v1399 = vpop.f32.mrb[0].mxu0
    %v1400 = vadd.f32 %v1178, %v1399
    %v1401 = vpop.f32.mrb[0].mxu0
    %v1402 = vadd.f32 %v1182, %v1401
    %v1403 = vpop.f32.mrb[0].mxu0
    %v1404 = vadd.f32 %v1178, %v1403
    %v1405 = vpop.f32.mrb[0].mxu0
    %v1406 = vadd.f32 %v1182, %v1405
    %1407 = vmatprep.mubr.bf16.mxu0 %v1116
    %1408 = vmatmul.mubr.bf16.gmra.mrb[0].mxu0 %v1115
    %v1409 = vpop.f32.mrb[0].mxu0
    %v1410 = vadd.f32 %v1178, %v1409
    %v1411 = vpop.f32.mrb[0].mxu0
    %v1412 = vadd.f32 %v1182, %v1411
    %v1413 = vpop.f32.mrb[0].mxu0
    %v1414 = vadd.f32 %v1178, %v1413
    %v1415 = vpop.f32.mrb[0].mxu0
    %v1416 = vadd.f32 %v1182, %v1415
    %1417 = vmatprep.mubr.bf16.mxu0 %v1118
    %1418 = vmatmul.mubr.bf16.gmra.mrb[0].mxu0 %v1117
    %v1419 = vpop.f32.mrb[0].mxu0
    %v1420 = vadd.f32 %v1178, %v1419
    %v1421 = vpop.f32.mrb[0].mxu0
    %v1422 = vadd.f32 %v1182, %v1421
    %v1423 = vpop.f32.mrb[0].mxu0
    %v1424 = vadd.f32 %v1178, %v1423
    %v1425 = vpop.f32.mrb[0].mxu0
    %v1426 = vadd.f32 %v1182, %v1425
    %1427 = vmatprep.mubr.bf16.mxu0 %v1120
    %1428 = vmatmul.mubr.bf16.gmra.mrb[0].mxu0 %v1119
    %v1429 = vpop.f32.mrb[0].mxu0
    %v1430 = vadd.f32 %v1178, %v1429
    %v1431 = vpop.f32.mrb[0].mxu0
    %v1432 = vadd.f32 %v1182, %v1431
    %v1433 = vpop.f32.mrb[0].mxu0
    %v1434 = vadd.f32 %v1178, %v1433
    %v1435 = vpop.f32.mrb[0].mxu0
    %v1436 = vadd.f32 %v1182, %v1435
    %1437 = vmatprep.mubr.bf16.mxu0 %v1122
    %1438 = vmatmul.mubr.bf16.gmra.mrb[0].mxu0 %v1121
    %v1439 = vpop.f32.mrb[0].mxu0
    %v1440 = vadd.f32 %v1178, %v1439
    %v1441 = vpop.f32.mrb[0].mxu0
    %v1442 = vadd.f32 %v1182, %v1441
    %v1443 = vpop.f32.mrb[0].mxu0
    %v1444 = vadd.f32 %v1178, %v1443
    %v1445 = vpop.f32.mrb[0].mxu0
    %v1446 = vadd.f32 %v1182, %v1445
    %1447 = vmatprep.mubr.bf16.mxu0 %v1124
    %1448 = vmatmul.mubr.bf16.gmra.mrb[0].mxu0 %v1123
    %v1449 = vpop.f32.mrb[0].mxu0
    %v1450 = vadd.f32 %v1178, %v1449
    %v1451 = vpop.f32.mrb[0].mxu0
    %v1452 = vadd.f32 %v1182, %v1451
    %v1453 = vpop.f32.mrb[0].mxu0
    %v1454 = vadd.f32 %v1178, %v1453
    %v1455 = vpop.f32.mrb[0].mxu0
    %v1456 = vadd.f32 %v1182, %v1455
    %1457 = vmatprep.mubr.bf16.mxu0 %v1126
    %1458 = vmatmul.mubr.bf16.gmra.mrb[0].mxu0 %v1125
    %v1459 = vpop.f32.mrb[0].mxu0
    %v1460 = vadd.f32 %v1178, %v1459
    %v1461 = vpop.f32.mrb[0].mxu0
    %v1462 = vadd.f32 %v1182, %v1461
    %v1463 = vpop.f32.mrb[0].mxu0
    %v1464 = vadd.f32 %v1178, %v1463
    %v1465 = vpop.f32.mrb[0].mxu0
    %v1466 = vadd.f32 %v1182, %v1465
    %1467 = vmatprep.mubr.bf16.mxu0 %v1128
    %1468 = vmatmul.mubr.bf16.gmra.mrb[0].mxu0 %v1127
    %v1469 = vpop.f32.mrb[0].mxu0
    %v1470 = vadd.f32 %v1178, %v1469
    %v1471 = vpop.f32.mrb[0].mxu0
    %v1472 = vadd.f32 %v1182, %v1471
    %v1473 = vpop.f32.mrb[0].mxu0
    %v1474 = vadd.f32 %v1178, %v1473
    %v1475 = vpop.f32.mrb[0].mxu0
    %v1476 = vadd.f32 %v1182, %v1475
    %1477 = vmatprep.mubr.bf16.mxu0 %v1130
    %1478 = vmatmul.mubr.bf16.gmra.mrb[0].mxu0 %v1129
    %v1479 = vpop.f32.mrb[0].mxu0
    %v1480 = vadd.f32 %v1178, %v1479
    %v1481 = vpop.f32.mrb[0].mxu0
    %v1482 = vadd.f32 %v1182, %v1481
    %v1483 = vpop.f32.mrb[0].mxu0
    %v1484 = vadd.f32 %v1178, %v1483
    %v1485 = vpop.f32.mrb[0].mxu0
    %v1486 = vadd.f32 %v1182, %v1485
    %1487 = vmatprep.mubr.bf16.mxu0 %v1132
    %1488 = vmatmul.mubr.bf16.gmra.mrb[0].mxu0 %v1131
    %v1489 = vpop.f32.mrb[0].mxu0
    %v1490 = vadd.f32 %v1178, %v1489
    %v1491 = vpop.f32.mrb[0].mxu0
    %v1492 = vadd.f32 %v1182, %v1491
    %v1493 = vpop.f32.mrb[0].mxu0
    %v1494 = vadd.f32 %v1178, %v1493
    %v1495 = vpop.f32.mrb[0].mxu0
    %v1496 = vadd.f32 %v1182, %v1495
    %1497 = vmatprep.mubr.bf16.mxu0 %v1134
    %1498 = vmatmul.mubr.bf16.gmra.mrb[0].mxu0 %v1133
    %v1499 = vpop.f32.mrb[0].mxu0
    %v1500 = vadd.f32 %v1178, %v1499
    %v1501 = vpop.f32.mrb[0].mxu0
    %v1502 = vadd.f32 %v1182, %v1501
    %v1503 = vpop.f32.mrb[0].mxu0
    %v1504 = vadd.f32 %v1178, %v1503
    %v1505 = vpop.f32.mrb[0].mxu0
    %v1506 = vadd.f32 %v1182, %v1505
    %1507 = vmatprep.mubr.bf16.mxu0 %v1136
    %1508 = vmatmul.mubr.bf16.gmra.mrb[0].mxu0 %v1135
    %v1509 = vpop.f32.mrb[0].mxu0
    %v1510 = vadd.f32 %v1178, %v1509
    %v1511 = vpop.f32.mrb[0].mxu0
    %v1512 = vadd.f32 %v1182, %v1511
    %v1513 = vpop.f32.mrb[0].mxu0
    %v1514 = vadd.f32 %v1178, %v1513
    %v1515 = vpop.f32.mrb[0].mxu0
    %v1516 = vadd.f32 %v1182, %v1515
    %1517 = vmatprep.mubr.bf16.mxu0 %v1138
    %1518 = vmatmul.mubr.bf16.gmra.mrb[0].mxu0 %v1137
    %v1519 = vpop.f32.mrb[0].mxu0
    %v1520 = vadd.f32 %v1178, %v1519
    %v1521 = vpop.f32.mrb[0].mxu0
    %v1522 = vadd.f32 %v1182, %v1521
    %v1523 = vpop.f32.mrb[0].mxu0
    %v1524 = vadd.f32 %v1178, %v1523
    %v1525 = vpop.f32.mrb[0].mxu0
    %v1526 = vadd.f32 %v1182, %v1525
    %1527 = vmatprep.mubr.bf16.mxu0 %v1140
    %1528 = vmatmul.mubr.bf16.gmra.mrb[0].mxu0 %v1139
    %v1529 = vpop.f32.mrb[0].mxu0
    %v1530 = vadd.f32 %v1178, %v1529
    %v1531 = vpop.f32.mrb[0].mxu0
    %v1532 = vadd.f32 %v1182, %v1531
    %v1533 = vpop.f32.mrb[0].mxu0
    %v1534 = vadd.f32 %v1178, %v1533
    %v1535 = vpop.f32.mrb[0].mxu0
    %v1536 = vadd.f32 %v1182, %v1535
    %1537 = vdwg.mxu0
    %v1538 = vtanh.pop %v1380
    %v1539 = vtanh.pop %v1382
    %v1540 = vtanh.pop %v1384
    %v1541 = vtanh.pop %v1386
    %v1542 = vtanh.pop %v1390
    %v1543 = vtanh.pop %v1392
    %v1544 = vtanh.pop %v1394
    %v1545 = vtanh.pop %v1396
    %v1546 = vtanh.pop %v1400
    %v1547 = vtanh.pop %v1402
    %v1548 = vtanh.pop %v1404
    %v1549 = vtanh.pop %v1406
    %v1550 = vtanh.pop %v1410
    %v1551 = vtanh.pop %v1412
    %v1552 = vtanh.pop %v1414
    %v1553 = vtanh.pop %v1416
    %v1554 = vtanh.pop %v1420
    %v1555 = vtanh.pop %v1422
    %v1556 = vtanh.pop %v1424
    %v1557 = vtanh.pop %v1426
    %v1558 = vtanh.pop %v1430
    %v1559 = vtanh.pop %v1432
    %v1560 = vtanh.pop %v1434
    %v1561 = vtanh.pop %v1436
    %v1562 = vtanh.pop %v1440
    %v1563 = vtanh.pop %v1442
    %v1564 = vtanh.pop %v1444
    %v1565 = vtanh.pop %v1446
    %v1566 = vtanh.pop %v1450
    %v1567 = vtanh.pop %v1452
    %v1568 = vtanh.pop %v1454
    %v1569 = vtanh.pop %v1456
    %v1570 = vtanh.pop %v1460
    %v1571 = vtanh.pop %v1462
    %v1572 = vtanh.pop %v1464
    %v1573 = vtanh.pop %v1466
    %v1574 = vtanh.pop %v1470
    %v1575 = vtanh.pop %v1472
    %v1576 = vtanh.pop %v1474
    %v1577 = vtanh.pop %v1476
    %v1578 = vtanh.pop %v1480
    %v1579 = vtanh.pop %v1482
    %v1580 = vtanh.pop %v1484
    %v1581 = vtanh.pop %v1486
    %v1582 = vtanh.pop %v1490
    %v1583 = vtanh.pop %v1492
    %v1584 = vtanh.pop %v1494
    %v1585 = vtanh.pop %v1496
    %v1586 = vtanh.pop %v1500
    %v1587 = vtanh.pop %v1502
    %v1588 = vtanh.pop %v1504
    %v1589 = vtanh.pop %v1506
    %v1590 = vtanh.pop %v1510
    %v1591 = vtanh.pop %v1512
    %v1592 = vtanh.pop %v1514
    %v1593 = vtanh.pop %v1516
    %v1594 = vtanh.pop %v1520
    %v1595 = vtanh.pop %v1522
    %v1596 = vtanh.pop %v1524
    %v1597 = vtanh.pop %v1526
    %v1598 = vtanh.pop %v1530
    %v1599 = vtanh.pop %v1532
    %v1600 = vtanh.pop %v1534
    %v1601 = vtanh.pop %v1536
    %v1602 = vpack.c.bf16 %v1540, %v1538
    %v1603 = vpack.c.bf16 %v1541, %v1539
    %v1604 = vpack.c.bf16 %v1544, %v1542
    %v1605 = vpack.c.bf16 %v1545, %v1543
    %v1606 = vpack.c.bf16 %v1548, %v1546
    %v1607 = vpack.c.bf16 %v1549, %v1547
    %v1608 = vpack.c.bf16 %v1552, %v1550
    %v1609 = vpack.c.bf16 %v1553, %v1551
    %v1610 = vpack.c.bf16 %v1556, %v1554
    %v1611 = vpack.c.bf16 %v1557, %v1555
    %v1612 = vpack.c.bf16 %v1560, %v1558
    %v1613 = vpack.c.bf16 %v1561, %v1559
    %v1614 = vpack.c.bf16 %v1564, %v1562
    %v1615 = vpack.c.bf16 %v1565, %v1563
    %v1616 = vpack.c.bf16 %v1568, %v1566
    %v1617 = vpack.c.bf16 %v1569, %v1567
    %v1618 = vpack.c.bf16 %v1572, %v1570
    %v1619 = vpack.c.bf16 %v1573, %v1571
    %v1620 = vpack.c.bf16 %v1576, %v1574
    %v1621 = vpack.c.bf16 %v1577, %v1575
    %v1622 = vpack.c.bf16 %v1580, %v1578
    %v1623 = vpack.c.bf16 %v1581, %v1579
    %v1624 = vpack.c.bf16 %v1584, %v1582
    %v1625 = vpack.c.bf16 %v1585, %v1583
    %v1626 = vpack.c.bf16 %v1588, %v1586
    %v1627 = vpack.c.bf16 %v1589, %v1587
    %v1628 = vpack.c.bf16 %v1592, %v1590
    %v1629 = vpack.c.bf16 %v1593, %v1591
    %v1630 = vpack.c.bf16 %v1596, %v1594
    %v1631 = vpack.c.bf16 %v1597, %v1595
    %v1632 = vpack.c.bf16 %v1600, %v1598
    %v1633 = vpack.c.bf16 %v1601, %v1599
    %v1634 = vld [vmem:[%s9] sm:$0xf]
    %v1635 = vld [vmem:[%s9 + $0x4] sm:$0xf]
    %v1636 = vld [vmem:[%s9 + $0x8] sm:$0xf]
    %v1637 = vld [vmem:[%s9 + $0xc] sm:$0xf]
    %v1638 = vld [vmem:[%s9 + $0x10] sm:$0xf]
    %v1639 = vld [vmem:[%s9 + $0x14] sm:$0xf]
    %v1640 = vld [vmem:[%s9 + $0x18] sm:$0xf]
    %v1641 = vld [vmem:[%s9 + $0x1c] sm:$0xf]
    %v1642 = vld [vmem:[%s9 + $0x20] sm:$0xf]
    %v1643 = vld [vmem:[%s9 + $0x24] sm:$0xf]
    %v1644 = vld [vmem:[%s9 + $0x28] sm:$0xf]
    %v1645 = vld [vmem:[%s9 + $0x2c] sm:$0xf]
    %v1646 = vld [vmem:[%s9 + $0x30] sm:$0xf]
    %v1647 = vld [vmem:[%s9 + $0x34] sm:$0xf]
    %v1648 = vld [vmem:[%s9 + $0x38] sm:$0xf]
    %v1649 = vld [vmem:[%s9 + $0x3c] sm:$0xf]
    %v1650 = vld [vmem:[%s9 + $0x40] sm:$0xf]
    %v1651 = vld [vmem:[%s9 + $0x44] sm:$0xf]
    %v1652 = vld [vmem:[%s9 + $0x48] sm:$0xf]
    %v1653 = vld [vmem:[%s9 + $0x4c] sm:$0xf]
    %v1654 = vld [vmem:[%s9 + $0x50] sm:$0xf]
    %v1655 = vld [vmem:[%s9 + $0x54] sm:$0xf]
    %v1656 = vld [vmem:[%s9 + $0x58] sm:$0xf]
    %v1657 = vld [vmem:[%s9 + $0x5c] sm:$0xf]
    %v1658 = vld [vmem:[%s9 + $0x60] sm:$0xf]
    %v1659 = vld [vmem:[%s9 + $0x64] sm:$0xf]
    %v1660 = vld [vmem:[%s9 + $0x68] sm:$0xf]
    %v1661 = vld [vmem:[%s9 + $0x6c] sm:$0xf]
    %v1662 = vld [vmem:[%s9 + $0x70] sm:$0xf]
    %v1663 = vld [vmem:[%s9 + $0x74] sm:$0xf]
    %v1664 = vld [vmem:[%s9 + $0x78] sm:$0xf]
    %v1665 = vld [vmem:[%s9 + $0x7c] sm:$0xf]
    %v1666 = vld [vmem:[%s10] sm:$0x1]
    %v1668 = vlaneseq
    %v1669 = vshrl.u32 %v1668, 7
    %v1670 = vsub.s32 0, %v1669
    %v1671 = vrot.slane %v1666, %v1670
    %v1705 = vunpack.c.l.b16 %v1634
    %v1706 = vunpack.c.l.b16 %v1635
    %v1707 = vunpack.c.l.b16 %v1636
    %v1708 = vunpack.c.l.b16 %v1637
    %v1709 = vunpack.c.l.b16 %v1638
    %v1710 = vunpack.c.l.b16 %v1639
    %v1711 = vunpack.c.l.b16 %v1640
    %v1712 = vunpack.c.l.b16 %v1641
    %v1713 = vunpack.c.l.b16 %v1642
    %v1714 = vunpack.c.l.b16 %v1643
    %v1715 = vunpack.c.l.b16 %v1644
    %v1716 = vunpack.c.l.b16 %v1645
    %v1717 = vunpack.c.l.b16 %v1646
    %v1718 = vunpack.c.l.b16 %v1647
    %v1719 = vunpack.c.l.b16 %v1648
    %v1720 = vunpack.c.l.b16 %v1649
    %v1721 = vunpack.c.l.b16 %v1650
    %v1722 = vunpack.c.l.b16 %v1651
    %v1723 = vunpack.c.l.b16 %v1652
    %v1724 = vunpack.c.l.b16 %v1653
    %v1725 = vunpack.c.l.b16 %v1654
    %v1726 = vunpack.c.l.b16 %v1655
    %v1727 = vunpack.c.l.b16 %v1656
    %v1728 = vunpack.c.l.b16 %v1657
    %v1729 = vunpack.c.l.b16 %v1658
    %v1730 = vunpack.c.l.b16 %v1659
    %v1731 = vunpack.c.l.b16 %v1660
    %v1732 = vunpack.c.l.b16 %v1661
    %v1733 = vunpack.c.l.b16 %v1662
    %v1734 = vunpack.c.l.b16 %v1663
    %v1735 = vunpack.c.l.b16 %v1664
    %v1736 = vunpack.c.l.b16 %v1665
    %v1737 = vpack.c.b16 %v1706, %v1705
    %v1738 = vpack.c.b16 %v1708, %v1707
    %v1739 = vpack.c.b16 %v1710, %v1709
    %v1740 = vpack.c.b16 %v1712, %v1711
    %v1741 = vpack.c.b16 %v1714, %v1713
    %v1742 = vpack.c.b16 %v1716, %v1715
    %v1743 = vpack.c.b16 %v1718, %v1717
    %v1744 = vpack.c.b16 %v1720, %v1719
    %v1745 = vpack.c.b16 %v1722, %v1721
    %v1746 = vpack.c.b16 %v1724, %v1723
    %v1747 = vpack.c.b16 %v1726, %v1725
    %v1748 = vpack.c.b16 %v1728, %v1727
    %v1749 = vpack.c.b16 %v1730, %v1729
    %v1750 = vpack.c.b16 %v1732, %v1731
    %v1751 = vpack.c.b16 %v1734, %v1733
    %v1752 = vpack.c.b16 %v1736, %v1735
    %1769 = vmatprep.subr.bf16.mxu0 0
    %1770 = vmatpush1.bf16.msra.mxu0 %v1737
    %1771 = vmatprep.subr.bf16.mxu0 0
    %1772 = vmatpush1.bf16.msra.mxu0 %v1738
    %1773 = vmatprep.subr.bf16.mxu0 0
    %1774 = vmatpush1.bf16.msra.mxu0 %v1739
    %1775 = vmatprep.subr.bf16.mxu0 0
    %1776 = vmatpush1.bf16.msra.mxu0 %v1740
    %1777 = vmatprep.subr.bf16.mxu0 0
    %1778 = vmatpush1.bf16.msra.mxu0 %v1741
    %1779 = vmatprep.subr.bf16.mxu0 0
    %1780 = vmatpush1.bf16.msra.mxu0 %v1742
    %1781 = vmatprep.subr.bf16.mxu0 0
    %1782 = vmatpush1.bf16.msra.mxu0 %v1743
    %1783 = vmatprep.subr.bf16.mxu0 0
    %1784 = vmatpush1.bf16.msra.mxu0 %v1744
    %1785 = vmatprep.subr.bf16.mxu0 0
    %1786 = vmatpush1.bf16.msra.mxu0 %v1745
    %1787 = vmatprep.subr.bf16.mxu0 0
    %1788 = vmatpush1.bf16.msra.mxu0 %v1746
    %1789 = vmatprep.subr.bf16.mxu0 0
    %1790 = vmatpush1.bf16.msra.mxu0 %v1747
    %1791 = vmatprep.subr.bf16.mxu0 0
    %1792 = vmatpush1.bf16.msra.mxu0 %v1748
    %1793 = vmatprep.subr.bf16.mxu0 0
    %1794 = vmatpush1.bf16.msra.mxu0 %v1749
    %1795 = vmatprep.subr.bf16.mxu0 0
    %1796 = vmatpush1.bf16.msra.mxu0 %v1750
    %1797 = vmatprep.subr.bf16.mxu0 0
    %1798 = vmatpush1.bf16.msra.mxu0 %v1751
    %1799 = vmatprep.subr.bf16.mxu0 0
    %1800 = vmatpush1.bf16.msra.mxu0 %v1752
    %1801 = vmatprep.mubr.bf16.mxu0 %v1603
    %1802 = vmatmul.mubr.bf16.gmra.mrb[0].mxu0 %v1602
    %v1803 = vpop.f32.mrb[0].mxu0
    %v1804 = vadd.f32 %v1671, %v1803
    %v1805 = vpop.f32.mrb[0].mxu0
    %v1806 = vpop.f32.mrb[0].mxu0
    %v1807 = vadd.f32 %v1671, %v1806
    %v1808 = vpop.f32.mrb[0].mxu0
    %1809 = vmatprep.mubr.bf16.mxu0 %v1605
    %1810 = vmatmul.mubr.bf16.gmra.mrb[0].mxu0 %v1604
    %v1811 = vpop.f32.mrb[0].mxu0
    %v1812 = vadd.f32 %v1671, %v1811
    %v1813 = vpop.f32.mrb[0].mxu0
    %v1814 = vpop.f32.mrb[0].mxu0
    %v1815 = vadd.f32 %v1671, %v1814
    %v1816 = vpop.f32.mrb[0].mxu0
    %1817 = vmatprep.mubr.bf16.mxu0 %v1607
    %1818 = vmatmul.mubr.bf16.gmra.mrb[0].mxu0 %v1606
    %v1819 = vpop.f32.mrb[0].mxu0
    %v1820 = vadd.f32 %v1671, %v1819
    %v1821 = vpop.f32.mrb[0].mxu0
    %v1822 = vpop.f32.mrb[0].mxu0
    %v1823 = vadd.f32 %v1671, %v1822
    %v1824 = vpop.f32.mrb[0].mxu0
    %1825 = vmatprep.mubr.bf16.mxu0 %v1609
    %1826 = vmatmul.mubr.bf16.gmra.mrb[0].mxu0 %v1608
    %v1827 = vpop.f32.mrb[0].mxu0
    %v1828 = vadd.f32 %v1671, %v1827
    %v1829 = vpop.f32.mrb[0].mxu0
    %v1830 = vpop.f32.mrb[0].mxu0
    %v1831 = vadd.f32 %v1671, %v1830
    %v1832 = vpop.f32.mrb[0].mxu0
    %1833 = vmatprep.mubr.bf16.mxu0 %v1611
    %1834 = vmatmul.mubr.bf16.gmra.mrb[0].mxu0 %v1610
    %v1835 = vpop.f32.mrb[0].mxu0
    %v1836 = vadd.f32 %v1671, %v1835
    %v1837 = vpop.f32.mrb[0].mxu0
    %v1838 = vpop.f32.mrb[0].mxu0
    %v1839 = vadd.f32 %v1671, %v1838
    %v1840 = vpop.f32.mrb[0].mxu0
    %1841 = vmatprep.mubr.bf16.mxu0 %v1613
    %1842 = vmatmul.mubr.bf16.gmra.mrb[0].mxu0 %v1612
    %v1843 = vpop.f32.mrb[0].mxu0
    %v1844 = vadd.f32 %v1671, %v1843
    %v1845 = vpop.f32.mrb[0].mxu0
    %v1846 = vpop.f32.mrb[0].mxu0
    %v1847 = vadd.f32 %v1671, %v1846
    %v1848 = vpop.f32.mrb[0].mxu0
    %1849 = vmatprep.mubr.bf16.mxu0 %v1615
    %1850 = vmatmul.mubr.bf16.gmra.mrb[0].mxu0 %v1614
    %v1851 = vpop.f32.mrb[0].mxu0
    %v1852 = vadd.f32 %v1671, %v1851
    %v1853 = vpop.f32.mrb[0].mxu0
    %v1854 = vpop.f32.mrb[0].mxu0
    %v1855 = vadd.f32 %v1671, %v1854
    %v1856 = vpop.f32.mrb[0].mxu0
    %1857 = vmatprep.mubr.bf16.mxu0 %v1617
    %1858 = vmatmul.mubr.bf16.gmra.mrb[0].mxu0 %v1616
    %v1859 = vpop.f32.mrb[0].mxu0
    %v1860 = vadd.f32 %v1671, %v1859
    %v1861 = vpop.f32.mrb[0].mxu0
    %v1862 = vpop.f32.mrb[0].mxu0
    %v1863 = vadd.f32 %v1671, %v1862
    %v1864 = vpop.f32.mrb[0].mxu0
    %1865 = vmatprep.mubr.bf16.mxu0 %v1619
    %1866 = vmatmul.mubr.bf16.gmra.mrb[0].mxu0 %v1618
    %v1867 = vpop.f32.mrb[0].mxu0
    %v1868 = vadd.f32 %v1671, %v1867
    %v1869 = vpop.f32.mrb[0].mxu0
    %v1870 = vpop.f32.mrb[0].mxu0
    %v1871 = vadd.f32 %v1671, %v1870
    %v1872 = vpop.f32.mrb[0].mxu0
    %1873 = vmatprep.mubr.bf16.mxu0 %v1621
    %1874 = vmatmul.mubr.bf16.gmra.mrb[0].mxu0 %v1620
    %v1875 = vpop.f32.mrb[0].mxu0
    %v1876 = vadd.f32 %v1671, %v1875
    %v1877 = vpop.f32.mrb[0].mxu0
    %v1878 = vpop.f32.mrb[0].mxu0
    %v1879 = vadd.f32 %v1671, %v1878
    %v1880 = vpop.f32.mrb[0].mxu0
    %1881 = vmatprep.mubr.bf16.mxu0 %v1623
    %1882 = vmatmul.mubr.bf16.gmra.mrb[0].mxu0 %v1622
    %v1883 = vpop.f32.mrb[0].mxu0
    %v1884 = vadd.f32 %v1671, %v1883
    %v1885 = vpop.f32.mrb[0].mxu0
    %v1886 = vpop.f32.mrb[0].mxu0
    %v1887 = vadd.f32 %v1671, %v1886
    %v1888 = vpop.f32.mrb[0].mxu0
    %1889 = vmatprep.mubr.bf16.mxu0 %v1625
    %1890 = vmatmul.mubr.bf16.gmra.mrb[0].mxu0 %v1624
    %v1891 = vpop.f32.mrb[0].mxu0
    %v1892 = vadd.f32 %v1671, %v1891
    %v1893 = vpop.f32.mrb[0].mxu0
    %v1894 = vpop.f32.mrb[0].mxu0
    %v1895 = vadd.f32 %v1671, %v1894
    %v1896 = vpop.f32.mrb[0].mxu0
    %1897 = vmatprep.mubr.bf16.mxu0 %v1627
    %1898 = vmatmul.mubr.bf16.gmra.mrb[0].mxu0 %v1626
    %v1899 = vpop.f32.mrb[0].mxu0
    %v1900 = vadd.f32 %v1671, %v1899
    %v1901 = vpop.f32.mrb[0].mxu0
    %v1902 = vpop.f32.mrb[0].mxu0
    %v1903 = vadd.f32 %v1671, %v1902
    %v1904 = vpop.f32.mrb[0].mxu0
    %1905 = vmatprep.mubr.bf16.mxu0 %v1629
    %1906 = vmatmul.mubr.bf16.gmra.mrb[0].mxu0 %v1628
    %v1907 = vpop.f32.mrb[0].mxu0
    %v1908 = vadd.f32 %v1671, %v1907
    %v1909 = vpop.f32.mrb[0].mxu0
    %v1910 = vpop.f32.mrb[0].mxu0
    %v1911 = vadd.f32 %v1671, %v1910
    %v1912 = vpop.f32.mrb[0].mxu0
    %1913 = vmatprep.mubr.bf16.mxu0 %v1631
    %1914 = vmatmul.mubr.bf16.gmra.mrb[0].mxu0 %v1630
    %v1915 = vpop.f32.mrb[0].mxu0
    %v1916 = vadd.f32 %v1671, %v1915
    %v1917 = vpop.f32.mrb[0].mxu0
    %v1918 = vpop.f32.mrb[0].mxu0
    %v1919 = vadd.f32 %v1671, %v1918
    %v1920 = vpop.f32.mrb[0].mxu0
    %1921 = vmatprep.mubr.bf16.mxu0 %v1633
    %1922 = vmatmul.mubr.bf16.gmra.mrb[0].mxu0 %v1632
    %v1923 = vpop.f32.mrb[0].mxu0
    %v1924 = vadd.f32 %v1671, %v1923
    %v1925 = vpop.f32.mrb[0].mxu0
    %v1926 = vpop.f32.mrb[0].mxu0
    %v1927 = vadd.f32 %v1671, %v1926
    %v1928 = vpop.f32.mrb[0].mxu0
    %1929 = vdwg.mxu0
    %v1930 = vtanh.pop %v1804
    %v1931 = vtanh.pop %v1807
    %v1932 = vtanh.pop %v1812
    %v1933 = vtanh.pop %v1815
    %v1934 = vtanh.pop %v1820
    %v1935 = vtanh.pop %v1823
    %v1936 = vtanh.pop %v1828
    %v1937 = vtanh.pop %v1831
    %v1938 = vtanh.pop %v1836
    %v1939 = vtanh.pop %v1839
    %v1940 = vtanh.pop %v1844
    %v1941 = vtanh.pop %v1847
    %v1942 = vtanh.pop %v1852
    %v1943 = vtanh.pop %v1855
    %v1944 = vtanh.pop %v1860
    %v1945 = vtanh.pop %v1863
    %v1946 = vtanh.pop %v1868
    %v1947 = vtanh.pop %v1871
    %v1948 = vtanh.pop %v1876
    %v1949 = vtanh.pop %v1879
    %v1950 = vtanh.pop %v1884
    %v1951 = vtanh.pop %v1887
    %v1952 = vtanh.pop %v1892
    %v1953 = vtanh.pop %v1895
    %v1954 = vtanh.pop %v1900
    %v1955 = vtanh.pop %v1903
    %v1956 = vtanh.pop %v1908
    %v1957 = vtanh.pop %v1911
    %v1958 = vtanh.pop %v1916
    %v1959 = vtanh.pop %v1919
    %v1960 = vtanh.pop %v1924
    %v1961 = vtanh.pop %v1927
    %1962 = vst [vmem:[#allocation2] sm:$0xff] %v1930
    %1963 = vst [vmem:[#allocation2 + $0x8] sm:$0xff] %v1931
    %1964 = vst [vmem:[#allocation2 + $0x10] sm:$0xff] %v1932
    %1965 = vst [vmem:[#allocation2 + $0x18] sm:$0xff] %v1933
    %1966 = vst [vmem:[#allocation2 + $0x20] sm:$0xff] %v1934
    %1967 = vst [vmem:[#allocation2 + $0x28] sm:$0xff] %v1935
    %1968 = vst [vmem:[#allocation2 + $0x30] sm:$0xff] %v1936
    %1969 = vst [vmem:[#allocation2 + $0x38] sm:$0xff] %v1937
    %1970 = vst [vmem:[#allocation2 + $0x40] sm:$0xff] %v1938
    %1971 = vst [vmem:[#allocation2 + $0x48] sm:$0xff] %v1939
    %1972 = vst [vmem:[#allocation2 + $0x50] sm:$0xff] %v1940
    %1973 = vst [vmem:[#allocation2 + $0x58] sm:$0xff] %v1941
    %1974 = vst [vmem:[#allocation2 + $0x60] sm:$0xff] %v1942
    %1975 = vst [vmem:[#allocation2 + $0x68] sm:$0xff] %v1943
    %1976 = vst [vmem:[#allocation2 + $0x70] sm:$0xff] %v1944
    %1977 = vst [vmem:[#allocation2 + $0x78] sm:$0xff] %v1945
    %1978 = vst [vmem:[#allocation2 + $0x80] sm:$0xff] %v1946
    %1979 = vst [vmem:[#allocation2 + $0x88] sm:$0xff] %v1947
    %1980 = vst [vmem:[#allocation2 + $0x90] sm:$0xff] %v1948
    %1981 = vst [vmem:[#allocation2 + $0x98] sm:$0xff] %v1949
    %1982 = vst [vmem:[#allocation2 + $0xa0] sm:$0xff] %v1950
    %1983 = vst [vmem:[#allocation2 + $0xa8] sm:$0xff] %v1951
    %1984 = vst [vmem:[#allocation2 + $0xb0] sm:$0xff] %v1952
    %1985 = vst [vmem:[#allocation2 + $0xb8] sm:$0xff] %v1953
    %1986 = vst [vmem:[#allocation2 + $0xc0] sm:$0xff] %v1954
    %1987 = vst [vmem:[#allocation2 + $0xc8] sm:$0xff] %v1955
    %1988 = vst [vmem:[#allocation2 + $0xd0] sm:$0xff] %v1956
    %1989 = vst [vmem:[#allocation2 + $0xd8] sm:$0xff] %v1957
    %1990 = vst [vmem:[#allocation2 + $0xe0] sm:$0xff] %v1958
    %1991 = vst [vmem:[#allocation2 + $0xe8] sm:$0xff] %v1959
    %1992 = vst [vmem:[#allocation2 + $0xf0] sm:$0xff] %v1960
    %1993 = vst [vmem:[#allocation2 + $0xf8] sm:$0xff] %v1961
    // Predicated region
    $region46: #{_forward_impl.1} parent=1 // pred_check
      _
    $region47: #{_forward_impl.1} parent=1 // pred_check_branch
      %1995 = sbr.rel (0) target = $region49
    $region48: #{_forward_impl.1} parent=1 // pred_region
      %s1997 = ssub.s32 4096, 4096
      %1998 = vsyncadd [#allocation3], %s1997
      %s1999 = sshll.u32 [#allocation2], 4
      %s2000 = int_to_ptr.vmem [resolvable:$true] %s1999
      %2005 = dma.vmem_to_hbm [thread:$0]  %s2000, 4096, %s11, [#allocation3], 128, 128, 8
    $region49: #{_forward_impl.1} parent=1 // pred_fallthru
      _
    // Predicated region
    $region50: #{_forward_impl.1} parent=1 // pred_check
      _
    $region51: #{_forward_impl.1} parent=1 // pred_check_branch
      %2007 = sbr.rel (0) target = $region53
    $region52: #{_forward_impl.1} parent=1 // pred_region
      %2008 = dma.done [#allocation3], 4096
    $region53: #{_forward_impl.1} parent=1 // pred_fallthru
      _
    %2009 = vsyncpa [#allocation3], 1

</llo_original>
